<compile_context>
chip_gen: v5e
topology: v5e:2x2
jax: 0.10.0
libtpu: 0.0.40
codegen_flags: <defaults>
</compile_context>

<pallas_src>
import jax
import jax.numpy as jnp
from jax.experimental import pallas as pl
from jax.experimental.pallas import tpu as pltpu

PARAM_ORDER = ("we1_cat", "we1_rad", "be1", "we2", "be2",
               "wn1_cat", "bn1", "wn2", "bn2", "wc1", "bc1", "wc2")

# bf16 matmul operands + f32 accumulation (native MXU dtype on v5e/v6e/v7x).
# Set to jnp.float32 for bit-for-bit f32 reference parity.
MATMUL_DTYPE = jnp.bfloat16


def _mm(a, b):
    """MXU matmul: operands in MATMUL_DTYPE, accumulation in f32."""
    return jnp.dot(a.astype(MATMUL_DTYPE), b.astype(MATMUL_DTYPE),
                   preferred_element_type=jnp.float32)


def _repeat_rows(a, n):
    """[R, C] -> [R*n, C]; row i repeated n consecutive times (receiver gather).

    Lowers to per-row sublane broadcasts + one sublane concat (no MXU push, no
    relayout) -- the 'structured copy' replacement for the R one-hot matmul.
    """
    r, c = a.shape
    return jnp.concatenate(
        [jnp.broadcast_to(a[i:i + 1, :], (n, c)) for i in range(r)], axis=0)


def _tile_rows(a, n):
    """[R, C] -> [n*R, C]; whole block tiled n times (sender gather)."""
    return jnp.concatenate([a] * n, axis=0)


def _round_up(v, m):
    return (v + m - 1) // m * m


def egnn_fused_kernel(h_in_ref, x_in_ref,
                      we1_cat_ref, we1_rad_ref, be1_ref, we2_ref, be2_ref,
                      wn1_cat_ref, bn1_ref, wn2_ref, bn2_ref,
                      wc1_ref, bc1_ref, wc2_ref,
                      out_ref,
                      h_sc, x_sc, rt_sc):
    """One grid step = one EGCL layer of one graph. grid = (graphs, layers)."""
    layer = pl.program_id(1)
    num_layers = pl.num_programs(1)
    N, H = h_sc.shape
    E = N * N
    W = out_ref.shape[-1]
    inv_deg = 1.0 / float(max(N - 1, 1))          # coord aggregation = mean over N-1 edges

    # ---- per-graph init: load carried state, build masked segment-sum selector ----
    @pl.when(layer == 0)
    def _init():
        h_sc[...] = h_in_ref[...]
        x_sc[...] = x_in_ref[...]
        # R_T[n, e] = 1 iff edge e = n*N + j with sender j != n  (self-loop masked here,
        # so no [E,*] mask multiply is needed later). Integer iota math only.
        e_col = jax.lax.broadcasted_iota(jnp.int32, (N, E), 1)
        n_row = jax.lax.broadcasted_iota(jnp.int32, (N, E), 0)
        lo = n_row * N
        sel = jnp.logical_and(e_col >= lo, e_col < lo + N)
        sel = jnp.logical_and(sel, e_col != n_row * (N + 1))
        rt_sc[...] = sel.astype(jnp.float32).astype(rt_sc.dtype)

    h = h_sc[...]                                  # [N,H]
    x = x_sc[...]                                  # [N,3]

    # ---- fused receiver/sender halves of the edge-MLP first Linear (one K=D push) ----
    proj = _mm(h, we1_cat_ref[...])                # [N, 2H]
    src_proj = proj[:, :H]                         # receiver half
    dst_proj = proj[:, H:]                         # sender half

    # ---- edge gathers as structured copies (edge e = i*N + j; i=receiver, j=sender) --
    src_e = _repeat_rows(src_proj, N)              # [E,H]  -> node e // N
    dst_e = _tile_rows(dst_proj, N)                # [E,H]  -> node e %  N
    x_recv = _repeat_rows(x, N)                    # [E,3]
    x_send = _tile_rows(x, N)                      # [E,3]
    diff = x_recv - x_send                         # [E,3]  x_i - x_j
    radial = jnp.sum(diff * diff, axis=-1, keepdims=True)              # [E,1]

    # ---- edge MLP (self-loop rows computed but excluded at aggregation) ----
    m1 = jnp.maximum(src_e + dst_e + radial * we1_rad_ref[...] + be1_ref[...], 0.0)
    m2 = jnp.maximum(_mm(m1, we2_ref[...]) + be2_ref[...], 0.0)        # [E,H]

    # ---- coord MLP ----
    c1 = jnp.maximum(_mm(m2, wc1_ref[...]) + bc1_ref[...], 0.0)        # [E,H]
    cw = _mm(c1, wc2_ref[...])                                         # [E,1]

    # ---- single fused segment reduction: messages + coordinate differences ----
    seg = _mm(rt_sc[...], jnp.concatenate([m2, cw * diff], axis=-1))   # [N, H+3]
    m_agg = seg[:, :H]                                                  # sum_j m_ij
    x_new = x + seg[:, H:H + 3] * inv_deg                               # mean_j w_ij (x_i-x_j)

    # ---- node MLP on concat(h, m_agg) (one K=D+H push), residual ----
    n1 = jnp.maximum(_mm(jnp.concatenate([h, m_agg], axis=-1), wn1_cat_ref[...])
                     + bn1_ref[...], 0.0)
    h_new = h + _mm(n1, wn2_ref[...]) + bn2_ref[...]

    h_sc[...] = h_new
    x_sc[...] = x_new

    # ---- last layer: SumReadout + single lane-dense packed output store ----
    @pl.when(layer == num_layers - 1)
    def _finalize():
        g_feat = jnp.sum(h_new, axis=0, keepdims=True)                 # [1,H] readout
        parts = [h_new,                                                # lanes [0:H)
                 x_new,                                                # lanes [H:H+3)
                 jnp.zeros((N, 32 - 3), jnp.float32),                  # pad to H+32
                 jnp.broadcast_to(g_feat, (N, H))]                     # lanes [H+32:2H+32)
        tail = W - (2 * H + 32)
        if tail > 0:
            parts.append(jnp.zeros((N, tail), jnp.float32))
        out_ref[...] = jnp.concatenate(parts, axis=-1)


def egnn_pallas(node_input, coord, stacked):
    """node_input [G,N,D], coord [G,N,3], stacked = list of [L,...] weights."""
    G, N, D = node_input.shape
    L, _, H = stacked[PARAM_ORDER.index("we2")].shape
    E = N * N
    W = _round_up(2 * H + 32, 128)                # lane-dense packed output width

    def graph_spec(arr):
        _, r, c = arr.shape
        return pl.BlockSpec((None, r, c), lambda g, l: (g, 0, 0))

    def layer_spec(arr):
        _, r, c = arr.shape
        return pl.BlockSpec((None, r, c), lambda g, l: (l, 0, 0))

    in_specs = ([graph_spec(node_input), graph_spec(coord)]
                + [layer_spec(w) for w in stacked])
    out_specs = pl.BlockSpec((None, N, W), lambda g, l: (g, 0, 0))

    flops = 2 * G * L * (N * D * 2 * H            # fused src/dst projection
                         + 2 * E * H * H          # edge-MLP 2nd linear + coord-MLP 1st
                         + E * H                  # coord weight (H -> 1)
                         + N * E * (H + 3)        # fused segment sums
                         + N * (D + H) * H        # node-MLP 1st linear (fused K)
                         + N * H * H)             # node-MLP 2nd linear
    bytes_accessed = 4 * (sum(int(w.size) for w in stacked)
                          + G * N * (D + 3) + G * N * W)

    # TODO(synk): for large N, tile the sender axis of the edge set and accumulate the
    # fused segment sums across sender tiles; size the tile against v7x's 64 MiB VMEM
    # (not 128 MiB) and set vmem_limit_bytes explicitly.  For many small graphs, grow G.
    slab = pl.pallas_call(
        egnn_fused_kernel,
        out_shape=jax.ShapeDtypeStruct((G, N, W), jnp.float32),
        grid_spec=pltpu.PrefetchScalarGridSpec(
            num_scalar_prefetch=0,
            grid=(G, L),                          # graphs (parallel) x layers (sequential)
            in_specs=in_specs,
            out_specs=out_specs,
            scratch_shapes=[pltpu.VMEM((N, H), jnp.float32),     # h carried across layers
                            pltpu.VMEM((N, 3), jnp.float32),     # x carried across layers
                            pltpu.VMEM((N, E), MATMUL_DTYPE)]),  # masked segment selector
        compiler_params=pltpu.CompilerParams(
            dimension_semantics=("parallel", "arbitrary")),
        cost_estimate=pl.CostEstimate(flops=flops, transcendentals=0,
                                      bytes_accessed=bytes_accessed),
    )(node_input, coord, *stacked)

    h_out = slab[:, :, :H]
    x_out = slab[:, :, H:H + 3]
    g_out = slab[:, 0, H + 32:2 * H + 32]
    return h_out, x_out, g_out


def _stack_params(layer_params):
    """Concatenate fusable weights (host side) and stack all layers on a leading axis."""
    fused = []
    for p in layer_params:
        fused.append({
            "we1_cat": jnp.concatenate([p["we1_src"], p["we1_dst"]], axis=1),  # [D,2H]
            "we1_rad": p["we1_rad"], "be1": p["be1"],
            "we2": p["we2"], "be2": p["be2"],
            "wn1_cat": jnp.concatenate([p["wn1_h"], p["wn1_m"]], axis=0),      # [D+H,H]
            "bn1": p["bn1"], "wn2": p["wn2"], "bn2": p["bn2"],
            "wc1": p["wc1"], "bc1": p["bc1"], "wc2": p["wc2"],
        })
    return [jnp.stack([q[k] for q in fused], axis=0) for k in PARAM_ORDER]


@jax.jit
def egnn_forward(node_input, coord, layer_params):
    D = node_input.shape[-1]
    H = layer_params[0]["we2"].shape[0]
    assert D == H, "residual=True (and per-layer weight stacking) requires input_dim == hidden_dim"
    stacked = _stack_params(layer_params)
    h_out, x_out, g_out = egnn_pallas(node_input, coord, stacked)
    # Module contract: dict with node/graph features; coords returned for validation.
    return {"graph_feature": g_out, "node_feature": h_out}, x_out


# ---------------- deterministic parameter init (PyTorch-like Linear init) -------------
def _linear_init(key, fan_in, fan_out):
    kw, kb = jax.random.split(key)
    bound = 1.0 / (fan_in ** 0.5)
    w = jax.random.uniform(kw, (fan_in, fan_out), jnp.float32, -bound, bound)
    b = jax.random.uniform(kb, (1, fan_out), jnp.float32, -bound, bound)
    return w, b


def init_egcl_params(key, node_dim, hidden_dim):
    keys = jax.random.split(key, 6)
    # edge_mlp: Linear(2*D + 1, H) -> ReLU -> Linear(H, H) -> ReLU
    we1, be1 = _linear_init(keys[0], 2 * node_dim + 1, hidden_dim)
    we2, be2 = _linear_init(keys[1], hidden_dim, hidden_dim)
    # node_mlp: Linear(D + H, H) -> ReLU -> Linear(H, H)
    wn1, bn1 = _linear_init(keys[2], node_dim + hidden_dim, hidden_dim)
    wn2, bn2 = _linear_init(keys[3], hidden_dim, hidden_dim)
    # coord_mlp: Linear(H, H) -> ReLU -> Linear(H, 1, bias=False) (xavier gain ~1e-3)
    wc1, bc1 = _linear_init(keys[4], hidden_dim, hidden_dim)
    wc2 = 0.001 * jax.random.normal(keys[5], (hidden_dim, 1), jnp.float32)
    return {
        "we1_src": we1[:node_dim], "we1_dst": we1[node_dim:2 * node_dim],
        "we1_rad": we1[2 * node_dim:], "be1": be1,
        "we2": we2, "be2": be2,
        "wn1_h": wn1[:node_dim], "wn1_m": wn1[node_dim:], "bn1": bn1,
        "wn2": wn2, "bn2": bn2,
        "wc1": wc1, "bc1": bc1, "wc2": wc2,
    }


# -------- pure-JAX dense reference with matched matmul precision (correctness check) ---
def _q(v):
    """Same operand rounding the kernel's MXU pushes apply to aggregation summands."""
    return v.astype(MATMUL_DTYPE).astype(jnp.float32)


def egcl_ref(h, x, p):
    N = h.shape[0]
    inv_deg = 1.0 / float(max(N - 1, 1))
    diff = x[:, None, :] - x[None, :, :]
    radial = jnp.sum(diff * diff, axis=-1, keepdims=True)
    A = _mm(h, p["we1_src"])
    B = _mm(h, p["we1_dst"])
    pre1 = A[:, None, :] + B[None, :, :] + radial * p["we1_rad"] + p["be1"]
    m1 = jnp.maximum(pre1, 0.0)
    m2 = jnp.maximum(_mm(m1.reshape(N * N, -1), p["we2"]).reshape(N, N, -1) + p["be2"], 0.0)
    mask = (1.0 - jnp.eye(N, dtype=jnp.float32))[..., None]
    c1 = jnp.maximum(_mm(m2.reshape(N * N, -1), p["wc1"]).reshape(N, N, -1) + p["bc1"], 0.0)
    cw = _mm(c1.reshape(N * N, -1), p["wc2"]).reshape(N, N, 1)
    x_out = x + jnp.sum(_q(diff * cw) * mask, axis=1) * inv_deg
    m_agg = jnp.sum(_q(m2) * mask, axis=1)
    n1 = jnp.maximum(_mm(h, p["wn1_h"]) + _mm(m_agg, p["wn1_m"]) + p["bn1"], 0.0)
    h_out = h + _mm(n1, p["wn2"]) + p["bn2"]
    return h_out, x_out


if __name__ == "__main__":
    # TODO(synk): arbitrary sparse graph.edge_list, variable-size packed graphs and
    # node_attr/edge_attr inputs are not implemented; equal-size fully-connected graphs
    # with the module's default (None) attrs are assumed.
    G, N, INPUT_DIM, HIDDEN_DIM, NUM_LAYER = 2, 16, 32, 32, 3   # residual needs D == H
    key = jax.random.PRNGKey(0)
    k_feat, k_coord, k_params = jax.random.split(key, 3)
    node_input = jax.random.normal(k_feat, (G, N, INPUT_DIM), jnp.float32)
    coord = jax.random.normal(k_coord, (G, N, 3), jnp.float32)
    layer_keys = jax.random.split(k_params, NUM_LAYER)
    layer_params = [
        init_egcl_params(layer_keys[i], INPUT_DIM if i == 0 else HIDDEN_DIM, HIDDEN_DIM)
        for i in range(NUM_LAYER)
    ]

    out, coord_out = egnn_forward(node_input, coord, layer_params)
    jax.block_until_ready((out, coord_out))

    # correctness check against a matched-precision pure-JAX dense reference
    # (set MATMUL_DTYPE = jnp.float32 above for an exact-f32 comparison)
    h_refs, x_refs = [], []
    for g in range(G):
        h_r, x_r = node_input[g], coord[g]
        for p in layer_params:
            h_r, x_r = egcl_ref(h_r, x_r, p)
        h_refs.append(h_r)
        x_refs.append(x_r)
    h_ref = jnp.stack(h_refs, axis=0)
    x_ref = jnp.stack(x_refs, axis=0)
    g_ref = jnp.sum(h_ref, axis=1)

    assert out["node_feature"].shape == (G, N, HIDDEN_DIM)
    assert out["graph_feature"].shape == (G, HIDDEN_DIM)
    assert coord_out.shape == (G, N, 3)
    assert jnp.allclose(out["node_feature"], h_ref, rtol=5e-3, atol=5e-3)
    assert jnp.allclose(coord_out, x_ref, rtol=5e-3, atol=5e-3)
    assert jnp.allclose(out["graph_feature"], g_ref, rtol=5e-3, atol=2e-2)
    print("KERNEL_OK")
</pallas_src>

<mosaic_0001>
module attributes {stable_mosaic.version = 11 : i64} {
  func.func @egnn_fused_kernel(%arg0: i32, %arg1: i32, %arg2: memref<1x16x32xf32, #tpu.memory_space<vmem>>, %arg3: memref<1x16x3xf32, #tpu.memory_space<vmem>>, %arg4: memref<1x32x64xf32, #tpu.memory_space<vmem>>, %arg5: memref<1x1x32xf32, #tpu.memory_space<vmem>>, %arg6: memref<1x1x32xf32, #tpu.memory_space<vmem>>, %arg7: memref<1x32x32xf32, #tpu.memory_space<vmem>>, %arg8: memref<1x1x32xf32, #tpu.memory_space<vmem>>, %arg9: memref<1x64x32xf32, #tpu.memory_space<vmem>>, %arg10: memref<1x1x32xf32, #tpu.memory_space<vmem>>, %arg11: memref<1x32x32xf32, #tpu.memory_space<vmem>>, %arg12: memref<1x1x32xf32, #tpu.memory_space<vmem>>, %arg13: memref<1x32x32xf32, #tpu.memory_space<vmem>>, %arg14: memref<1x1x32xf32, #tpu.memory_space<vmem>>, %arg15: memref<1x32x1xf32, #tpu.memory_space<vmem>>, %arg16: memref<1x16x128xf32, #tpu.memory_space<vmem>>, %arg17: memref<16x32xf32, #tpu.memory_space<vmem>>, %arg18: memref<16x3xf32, #tpu.memory_space<vmem>>, %arg19: memref<16x256xbf16, #tpu.memory_space<vmem>>) attributes {dimension_semantics = [#tpu.dimension_semantics<parallel>, #tpu.dimension_semantics<arbitrary>], iteration_bounds = array<i64: 2, 3>, scalar_prefetch = 0 : i64, scratch_operands = 3 : i64, tpu.core_type = #tpu.core_type<tc>, window_params = [{transform_indices = @transform_0, window_bounds = array<i64: 1, 16, 32>}, {transform_indices = @transform_1, window_bounds = array<i64: 1, 16, 3>}, {transform_indices = @transform_2, window_bounds = array<i64: 1, 32, 64>}, {transform_indices = @transform_3, window_bounds = array<i64: 1, 1, 32>}, {transform_indices = @transform_4, window_bounds = array<i64: 1, 1, 32>}, {transform_indices = @transform_5, window_bounds = array<i64: 1, 32, 32>}, {transform_indices = @transform_6, window_bounds = array<i64: 1, 1, 32>}, {transform_indices = @transform_7, window_bounds = array<i64: 1, 64, 32>}, {transform_indices = @transform_8, window_bounds = array<i64: 1, 1, 32>}, {transform_indices = @transform_9, window_bounds = array<i64: 1, 32, 32>}, {transform_indices = @transform_10, window_bounds = array<i64: 1, 1, 32>}, {transform_indices = @transform_11, window_bounds = array<i64: 1, 32, 32>}, {transform_indices = @transform_12, window_bounds = array<i64: 1, 1, 32>}, {transform_indices = @transform_13, window_bounds = array<i64: 1, 32, 1>}, {transform_indices = @transform_14, window_bounds = array<i64: 1, 16, 128>}]} {
    %c0_i32 = arith.constant 0 : i32
    %0 = arith.cmpi eq, %arg1, %c0_i32 : i32
    %1 = arith.extui %0 : i1 to i32
    %c0_i32_0 = arith.constant 0 : i32
    %2 = arith.cmpi ne, %1, %c0_i32_0 : i32
    scf.if %2 {
      %c0_59 = arith.constant 0 : index
      %c0_60 = arith.constant 0 : index
      %c0_61 = arith.constant 0 : index
      %194 = vector.load %arg2[%c0_59, %c0_60, %c0_61] : memref<1x16x32xf32, #tpu.memory_space<vmem>>, vector<1x16x32xf32>
      %195 = vector.shape_cast %194 : vector<1x16x32xf32> to vector<16x32xf32>
      %c0_62 = arith.constant 0 : index
      %c0_63 = arith.constant 0 : index
      %196 = vector.load %arg17[%c0_62, %c0_63] : memref<16x32xf32, #tpu.memory_space<vmem>>, vector<16x32xf32>
      tpu.vector_store %arg17[%c0_62, %c0_63], %195 {strides = array<i32>} : memref<16x32xf32, #tpu.memory_space<vmem>>, vector<16x32xf32>,
      %c0_64 = arith.constant 0 : index
      %c0_65 = arith.constant 0 : index
      %c0_66 = arith.constant 0 : index
      %197 = vector.load %arg3[%c0_64, %c0_65, %c0_66] : memref<1x16x3xf32, #tpu.memory_space<vmem>>, vector<1x16x3xf32>
      %198 = vector.shape_cast %197 : vector<1x16x3xf32> to vector<16x3xf32>
      %c0_67 = arith.constant 0 : index
      %c0_68 = arith.constant 0 : index
      %199 = vector.load %arg18[%c0_67, %c0_68] : memref<16x3xf32, #tpu.memory_space<vmem>>, vector<16x3xf32>
      tpu.vector_store %arg18[%c0_67, %c0_68], %198 {strides = array<i32>} : memref<16x3xf32, #tpu.memory_space<vmem>>, vector<16x3xf32>,
      %200 = tpu.iota {dimensions = array<i32: 1>} : vector<16x256xi32>
      %201 = tpu.iota {dimensions = array<i32: 0>} : vector<16x256xi32>
      %c16_i32 = arith.constant 16 : i32
      %202 = vector.broadcast %c16_i32 : i32 to vector<16x256xi32>
      %203 = arith.muli %201, %202 : vector<16x256xi32>
      %204 = arith.cmpi sge, %200, %203 : vector<16x256xi32>
      %c16_i32_69 = arith.constant 16 : i32
      %205 = vector.broadcast %c16_i32_69 : i32 to vector<16x256xi32>
      %206 = arith.addi %203, %205 : vector<16x256xi32>
      %207 = arith.cmpi slt, %200, %206 : vector<16x256xi32>
      %208 = arith.andi %204, %207 : vector<16x256xi1>
      %c17_i32 = arith.constant 17 : i32
      %209 = vector.broadcast %c17_i32 : i32 to vector<16x256xi32>
      %210 = arith.muli %201, %209 : vector<16x256xi32>
      %211 = arith.cmpi ne, %200, %210 : vector<16x256xi32>
      %212 = arith.andi %208, %211 : vector<16x256xi1>
      %213 = arith.extui %212 : vector<16x256xi1> to vector<16x256xi32>
      %214 = arith.sitofp %213 : vector<16x256xi32> to vector<16x256xf32>
      %215 = arith.truncf %214 : vector<16x256xf32> to vector<16x256xbf16>
      %c0_70 = arith.constant 0 : index
      %c0_71 = arith.constant 0 : index
      %216 = vector.load %arg19[%c0_70, %c0_71] : memref<16x256xbf16, #tpu.memory_space<vmem>>, vector<16x256xbf16>
      tpu.vector_store %arg19[%c0_70, %c0_71], %215 {strides = array<i32>} : memref<16x256xbf16, #tpu.memory_space<vmem>>, vector<16x256xbf16>,
    } else {
    }
    %c0 = arith.constant 0 : index
    %c0_1 = arith.constant 0 : index
    %3 = vector.load %arg17[%c0, %c0_1] : memref<16x32xf32, #tpu.memory_space<vmem>>, vector<16x32xf32>
    %c0_2 = arith.constant 0 : index
    %c0_3 = arith.constant 0 : index
    %4 = vector.load %arg18[%c0_2, %c0_3] : memref<16x3xf32, #tpu.memory_space<vmem>>, vector<16x3xf32>
    %c0_4 = arith.constant 0 : index
    %c0_5 = arith.constant 0 : index
    %c0_6 = arith.constant 0 : index
    %5 = vector.load %arg4[%c0_4, %c0_5, %c0_6] : memref<1x32x64xf32, #tpu.memory_space<vmem>>, vector<1x32x64xf32>
    %6 = vector.shape_cast %5 : vector<1x32x64xf32> to vector<32x64xf32>
    %7 = arith.truncf %3 : vector<16x32xf32> to vector<16x32xbf16>
    %8 = arith.truncf %6 : vector<32x64xf32> to vector<32x64xbf16>
    %cst = arith.constant dense<0.000000e+00> : vector<16x64xf32>
    %9 = tpu.matmul %7, %8, %cst {dimension_numbers = #tpu.dot_dimension_numbers<[1], [0], [0], [1], [0, 0, 1, 1], [], []>} : vector<16x32xbf16>, vector<32x64xbf16>, vector<16x64xf32> -> vector<16x64xf32>
    %10 = vector.extract_strided_slice %9 {offsets = [0, 0], sizes = [16, 32], strides = [1, 1]} : vector<16x64xf32> to vector<16x32xf32>
    %11 = vector.extract_strided_slice %9 {offsets = [0, 32], sizes = [16, 32], strides = [1, 1]} : vector<16x64xf32> to vector<16x32xf32>
    %12 = vector.extract_strided_slice %10 {offsets = [0, 0], sizes = [1, 32], strides = [1, 1]} : vector<16x32xf32> to vector<1x32xf32>
    %13 = vector.shape_cast %12 : vector<1x32xf32> to vector<1x32xf32>
    %14 = vector.broadcast %13 : vector<1x32xf32> to vector<16x32xf32>
    %15 = vector.extract_strided_slice %10 {offsets = [1, 0], sizes = [1, 32], strides = [1, 1]} : vector<16x32xf32> to vector<1x32xf32>
    %16 = vector.shape_cast %15 : vector<1x32xf32> to vector<1x32xf32>
    %17 = vector.broadcast %16 : vector<1x32xf32> to vector<16x32xf32>
    %18 = vector.extract_strided_slice %10 {offsets = [2, 0], sizes = [1, 32], strides = [1, 1]} : vector<16x32xf32> to vector<1x32xf32>
    %19 = vector.shape_cast %18 : vector<1x32xf32> to vector<1x32xf32>
    %20 = vector.broadcast %19 : vector<1x32xf32> to vector<16x32xf32>
    %21 = vector.extract_strided_slice %10 {offsets = [3, 0], sizes = [1, 32], strides = [1, 1]} : vector<16x32xf32> to vector<1x32xf32>
    %22 = vector.shape_cast %21 : vector<1x32xf32> to vector<1x32xf32>
    %23 = vector.broadcast %22 : vector<1x32xf32> to vector<16x32xf32>
    %24 = vector.extract_strided_slice %10 {offsets = [4, 0], sizes = [1, 32], strides = [1, 1]} : vector<16x32xf32> to vector<1x32xf32>
    %25 = vector.shape_cast %24 : vector<1x32xf32> to vector<1x32xf32>
    %26 = vector.broadcast %25 : vector<1x32xf32> to vector<16x32xf32>
    %27 = vector.extract_strided_slice %10 {offsets = [5, 0], sizes = [1, 32], strides = [1, 1]} : vector<16x32xf32> to vector<1x32xf32>
    %28 = vector.shape_cast %27 : vector<1x32xf32> to vector<1x32xf32>
    %29 = vector.broadcast %28 : vector<1x32xf32> to vector<16x32xf32>
    %30 = vector.extract_strided_slice %10 {offsets = [6, 0], sizes = [1, 32], strides = [1, 1]} : vector<16x32xf32> to vector<1x32xf32>
    %31 = vector.shape_cast %30 : vector<1x32xf32> to vector<1x32xf32>
    %32 = vector.broadcast %31 : vector<1x32xf32> to vector<16x32xf32>
    %33 = vector.extract_strided_slice %10 {offsets = [7, 0], sizes = [1, 32], strides = [1, 1]} : vector<16x32xf32> to vector<1x32xf32>
    %34 = vector.shape_cast %33 : vector<1x32xf32> to vector<1x32xf32>
    %35 = vector.broadcast %34 : vector<1x32xf32> to vector<16x32xf32>
    %36 = vector.extract_strided_slice %10 {offsets = [8, 0], sizes = [1, 32], strides = [1, 1]} : vector<16x32xf32> to vector<1x32xf32>
    %37 = vector.shape_cast %36 : vector<1x32xf32> to vector<1x32xf32>
    %38 = vector.broadcast %37 : vector<1x32xf32> to vector<16x32xf32>
    %39 = vector.extract_strided_slice %10 {offsets = [9, 0], sizes = [1, 32], strides = [1, 1]} : vector<16x32xf32> to vector<1x32xf32>
    %40 = vector.shape_cast %39 : vector<1x32xf32> to vector<1x32xf32>
    %41 = vector.broadcast %40 : vector<1x32xf32> to vector<16x32xf32>
    %42 = vector.extract_strided_slice %10 {offsets = [10, 0], sizes = [1, 32], strides = [1, 1]} : vector<16x32xf32> to vector<1x32xf32>
    %43 = vector.shape_cast %42 : vector<1x32xf32> to vector<1x32xf32>
    %44 = vector.broadcast %43 : vector<1x32xf32> to vector<16x32xf32>
    %45 = vector.extract_strided_slice %10 {offsets = [11, 0], sizes = [1, 32], strides = [1, 1]} : vector<16x32xf32> to vector<1x32xf32>
    %46 = vector.shape_cast %45 : vector<1x32xf32> to vector<1x32xf32>
    %47 = vector.broadcast %46 : vector<1x32xf32> to vector<16x32xf32>
    %48 = vector.extract_strided_slice %10 {offsets = [12, 0], sizes = [1, 32], strides = [1, 1]} : vector<16x32xf32> to vector<1x32xf32>
    %49 = vector.shape_cast %48 : vector<1x32xf32> to vector<1x32xf32>
    %50 = vector.broadcast %49 : vector<1x32xf32> to vector<16x32xf32>
    %51 = vector.extract_strided_slice %10 {offsets = [13, 0], sizes = [1, 32], strides = [1, 1]} : vector<16x32xf32> to vector<1x32xf32>
    %52 = vector.shape_cast %51 : vector<1x32xf32> to vector<1x32xf32>
    %53 = vector.broadcast %52 : vector<1x32xf32> to vector<16x32xf32>
    %54 = vector.extract_strided_slice %10 {offsets = [14, 0], sizes = [1, 32], strides = [1, 1]} : vector<16x32xf32> to vector<1x32xf32>
    %55 = vector.shape_cast %54 : vector<1x32xf32> to vector<1x32xf32>
    %56 = vector.broadcast %55 : vector<1x32xf32> to vector<16x32xf32>
    %57 = vector.extract_strided_slice %10 {offsets = [15, 0], sizes = [1, 32], strides = [1, 1]} : vector<16x32xf32> to vector<1x32xf32>
    %58 = vector.shape_cast %57 : vector<1x32xf32> to vector<1x32xf32>
    %59 = vector.broadcast %58 : vector<1x32xf32> to vector<16x32xf32>
    %60 = tpu.concatenate %14, %17, %20, %23, %26, %29, %32, %35, %38, %41, %44, %47, %50, %53, %56, %59 in 0 : vector<16x32xf32>, vector<16x32xf32>, vector<16x32xf32>, vector<16x32xf32>, vector<16x32xf32>, vector<16x32xf32>, vector<16x32xf32>, vector<16x32xf32>, vector<16x32xf32>, vector<16x32xf32>, vector<16x32xf32>, vector<16x32xf32>, vector<16x32xf32>, vector<16x32xf32>, vector<16x32xf32>, vector<16x32xf32> -> vector<256x32xf32>
    %61 = tpu.concatenate %11, %11, %11, %11, %11, %11, %11, %11, %11, %11, %11, %11, %11, %11, %11, %11 in 0 : vector<16x32xf32>, vector<16x32xf32>, vector<16x32xf32>, vector<16x32xf32>, vector<16x32xf32>, vector<16x32xf32>, vector<16x32xf32>, vector<16x32xf32>, vector<16x32xf32>, vector<16x32xf32>, vector<16x32xf32>, vector<16x32xf32>, vector<16x32xf32>, vector<16x32xf32>, vector<16x32xf32>, vector<16x32xf32> -> vector<256x32xf32>
    %62 = vector.extract_strided_slice %4 {offsets = [0, 0], sizes = [1, 3], strides = [1, 1]} : vector<16x3xf32> to vector<1x3xf32>
    %63 = vector.shape_cast %62 : vector<1x3xf32> to vector<1x3xf32>
    %64 = vector.broadcast %63 : vector<1x3xf32> to vector<16x3xf32>
    %65 = vector.extract_strided_slice %4 {offsets = [1, 0], sizes = [1, 3], strides = [1, 1]} : vector<16x3xf32> to vector<1x3xf32>
    %66 = vector.shape_cast %65 : vector<1x3xf32> to vector<1x3xf32>
    %67 = vector.broadcast %66 : vector<1x3xf32> to vector<16x3xf32>
    %68 = vector.extract_strided_slice %4 {offsets = [2, 0], sizes = [1, 3], strides = [1, 1]} : vector<16x3xf32> to vector<1x3xf32>
    %69 = vector.shape_cast %68 : vector<1x3xf32> to vector<1x3xf32>
    %70 = vector.broadcast %69 : vector<1x3xf32> to vector<16x3xf32>
    %71 = vector.extract_strided_slice %4 {offsets = [3, 0], sizes = [1, 3], strides = [1, 1]} : vector<16x3xf32> to vector<1x3xf32>
    %72 = vector.shape_cast %71 : vector<1x3xf32> to vector<1x3xf32>
    %73 = vector.broadcast %72 : vector<1x3xf32> to vector<16x3xf32>
    %74 = vector.extract_strided_slice %4 {offsets = [4, 0], sizes = [1, 3], strides = [1, 1]} : vector<16x3xf32> to vector<1x3xf32>
    %75 = vector.shape_cast %74 : vector<1x3xf32> to vector<1x3xf32>
    %76 = vector.broadcast %75 : vector<1x3xf32> to vector<16x3xf32>
    %77 = vector.extract_strided_slice %4 {offsets = [5, 0], sizes = [1, 3], strides = [1, 1]} : vector<16x3xf32> to vector<1x3xf32>
    %78 = vector.shape_cast %77 : vector<1x3xf32> to vector<1x3xf32>
    %79 = vector.broadcast %78 : vector<1x3xf32> to vector<16x3xf32>
    %80 = vector.extract_strided_slice %4 {offsets = [6, 0], sizes = [1, 3], strides = [1, 1]} : vector<16x3xf32> to vector<1x3xf32>
    %81 = vector.shape_cast %80 : vector<1x3xf32> to vector<1x3xf32>
    %82 = vector.broadcast %81 : vector<1x3xf32> to vector<16x3xf32>
    %83 = vector.extract_strided_slice %4 {offsets = [7, 0], sizes = [1, 3], strides = [1, 1]} : vector<16x3xf32> to vector<1x3xf32>
    %84 = vector.shape_cast %83 : vector<1x3xf32> to vector<1x3xf32>
    %85 = vector.broadcast %84 : vector<1x3xf32> to vector<16x3xf32>
    %86 = vector.extract_strided_slice %4 {offsets = [8, 0], sizes = [1, 3], strides = [1, 1]} : vector<16x3xf32> to vector<1x3xf32>
    %87 = vector.shape_cast %86 : vector<1x3xf32> to vector<1x3xf32>
    %88 = vector.broadcast %87 : vector<1x3xf32> to vector<16x3xf32>
    %89 = vector.extract_strided_slice %4 {offsets = [9, 0], sizes = [1, 3], strides = [1, 1]} : vector<16x3xf32> to vector<1x3xf32>
    %90 = vector.shape_cast %89 : vector<1x3xf32> to vector<1x3xf32>
    %91 = vector.broadcast %90 : vector<1x3xf32> to vector<16x3xf32>
    %92 = vector.extract_strided_slice %4 {offsets = [10, 0], sizes = [1, 3], strides = [1, 1]} : vector<16x3xf32> to vector<1x3xf32>
    %93 = vector.shape_cast %92 : vector<1x3xf32> to vector<1x3xf32>
    %94 = vector.broadcast %93 : vector<1x3xf32> to vector<16x3xf32>
    %95 = vector.extract_strided_slice %4 {offsets = [11, 0], sizes = [1, 3], strides = [1, 1]} : vector<16x3xf32> to vector<1x3xf32>
    %96 = vector.shape_cast %95 : vector<1x3xf32> to vector<1x3xf32>
    %97 = vector.broadcast %96 : vector<1x3xf32> to vector<16x3xf32>
    %98 = vector.extract_strided_slice %4 {offsets = [12, 0], sizes = [1, 3], strides = [1, 1]} : vector<16x3xf32> to vector<1x3xf32>
    %99 = vector.shape_cast %98 : vector<1x3xf32> to vector<1x3xf32>
    %100 = vector.broadcast %99 : vector<1x3xf32> to vector<16x3xf32>
    %101 = vector.extract_strided_slice %4 {offsets = [13, 0], sizes = [1, 3], strides = [1, 1]} : vector<16x3xf32> to vector<1x3xf32>
    %102 = vector.shape_cast %101 : vector<1x3xf32> to vector<1x3xf32>
    %103 = vector.broadcast %102 : vector<1x3xf32> to vector<16x3xf32>
    %104 = vector.extract_strided_slice %4 {offsets = [14, 0], sizes = [1, 3], strides = [1, 1]} : vector<16x3xf32> to vector<1x3xf32>
    %105 = vector.shape_cast %104 : vector<1x3xf32> to vector<1x3xf32>
    %106 = vector.broadcast %105 : vector<1x3xf32> to vector<16x3xf32>
    %107 = vector.extract_strided_slice %4 {offsets = [15, 0], sizes = [1, 3], strides = [1, 1]} : vector<16x3xf32> to vector<1x3xf32>
    %108 = vector.shape_cast %107 : vector<1x3xf32> to vector<1x3xf32>
    %109 = vector.broadcast %108 : vector<1x3xf32> to vector<16x3xf32>
    %110 = tpu.concatenate %64, %67, %70, %73, %76, %79, %82, %85, %88, %91, %94, %97, %100, %103, %106, %109 in 0 : vector<16x3xf32>, vector<16x3xf32>, vector<16x3xf32>, vector<16x3xf32>, vector<16x3xf32>, vector<16x3xf32>, vector<16x3xf32>, vector<16x3xf32>, vector<16x3xf32>, vector<16x3xf32>, vector<16x3xf32>, vector<16x3xf32>, vector<16x3xf32>, vector<16x3xf32>, vector<16x3xf32>, vector<16x3xf32> -> vector<256x3xf32>
    %111 = tpu.concatenate %4, %4, %4, %4, %4, %4, %4, %4, %4, %4, %4, %4, %4, %4, %4, %4 in 0 : vector<16x3xf32>, vector<16x3xf32>, vector<16x3xf32>, vector<16x3xf32>, vector<16x3xf32>, vector<16x3xf32>, vector<16x3xf32>, vector<16x3xf32>, vector<16x3xf32>, vector<16x3xf32>, vector<16x3xf32>, vector<16x3xf32>, vector<16x3xf32>, vector<16x3xf32>, vector<16x3xf32>, vector<16x3xf32> -> vector<256x3xf32>
    %112 = arith.subf %110, %111 : vector<256x3xf32>
    %113 = arith.mulf %112, %112 : vector<256x3xf32>
    %cst_7 = arith.constant dense<0.000000e+00> : vector<256xf32>
    %114 = vector.multi_reduction <add>, %113, %cst_7 [1] : vector<256x3xf32> to vector<256xf32>
    %115 = vector.shape_cast %114 : vector<256xf32> to vector<256x1xf32>
    %116 = arith.addf %60, %61 : vector<256x32xf32>
    %c0_8 = arith.constant 0 : index
    %c0_9 = arith.constant 0 : index
    %c0_10 = arith.constant 0 : index
    %117 = vector.load %arg5[%c0_8, %c0_9, %c0_10] : memref<1x1x32xf32, #tpu.memory_space<vmem>>, vector<1x1x32xf32>
    %118 = vector.shape_cast %117 : vector<1x1x32xf32> to vector<1x32xf32>
    %119 = vector.broadcast %115 : vector<256x1xf32> to vector<256x32xf32>
    %120 = vector.broadcast %118 : vector<1x32xf32> to vector<256x32xf32>
    %121 = arith.mulf %119, %120 : vector<256x32xf32>
    %122 = arith.addf %116, %121 : vector<256x32xf32>
    %c0_11 = arith.constant 0 : index
    %c0_12 = arith.constant 0 : index
    %c0_13 = arith.constant 0 : index
    %123 = vector.load %arg6[%c0_11, %c0_12, %c0_13] : memref<1x1x32xf32, #tpu.memory_space<vmem>>, vector<1x1x32xf32>
    %124 = vector.shape_cast %123 : vector<1x1x32xf32> to vector<1x32xf32>
    %125 = vector.broadcast %124 : vector<1x32xf32> to vector<256x32xf32>
    %126 = arith.addf %122, %125 : vector<256x32xf32>
    %cst_14 = arith.constant 0.000000e+00 : f32
    %127 = vector.broadcast %cst_14 : f32 to vector<256x32xf32>
    %128 = arith.maximumf %126, %127 : vector<256x32xf32>
    %c0_15 = arith.constant 0 : index
    %c0_16 = arith.constant 0 : index
    %c0_17 = arith.constant 0 : index
    %129 = vector.load %arg7[%c0_15, %c0_16, %c0_17] : memref<1x32x32xf32, #tpu.memory_space<vmem>>, vector<1x32x32xf32>
    %130 = vector.shape_cast %129 : vector<1x32x32xf32> to vector<32x32xf32>
    %131 = arith.truncf %128 : vector<256x32xf32> to vector<256x32xbf16>
    %132 = arith.truncf %130 : vector<32x32xf32> to vector<32x32xbf16>
    %cst_18 = arith.constant dense<0.000000e+00> : vector<256x32xf32>
    %133 = tpu.matmul %131, %132, %cst_18 {dimension_numbers = #tpu.dot_dimension_numbers<[1], [0], [0], [1], [0, 0, 1, 1], [], []>} : vector<256x32xbf16>, vector<32x32xbf16>, vector<256x32xf32> -> vector<256x32xf32>
    %c0_19 = arith.constant 0 : index
    %c0_20 = arith.constant 0 : index
    %c0_21 = arith.constant 0 : index
    %134 = vector.load %arg8[%c0_19, %c0_20, %c0_21] : memref<1x1x32xf32, #tpu.memory_space<vmem>>, vector<1x1x32xf32>
    %135 = vector.shape_cast %134 : vector<1x1x32xf32> to vector<1x32xf32>
    %136 = vector.broadcast %135 : vector<1x32xf32> to vector<256x32xf32>
    %137 = arith.addf %133, %136 : vector<256x32xf32>
    %cst_22 = arith.constant 0.000000e+00 : f32
    %138 = vector.broadcast %cst_22 : f32 to vector<256x32xf32>
    %139 = arith.maximumf %137, %138 : vector<256x32xf32>
    %c0_23 = arith.constant 0 : index
    %c0_24 = arith.constant 0 : index
    %c0_25 = arith.constant 0 : index
    %140 = vector.load %arg13[%c0_23, %c0_24, %c0_25] : memref<1x32x32xf32, #tpu.memory_space<vmem>>, vector<1x32x32xf32>
    %141 = vector.shape_cast %140 : vector<1x32x32xf32> to vector<32x32xf32>
    %142 = arith.truncf %139 : vector<256x32xf32> to vector<256x32xbf16>
    %143 = arith.truncf %141 : vector<32x32xf32> to vector<32x32xbf16>
    %cst_26 = arith.constant dense<0.000000e+00> : vector<256x32xf32>
    %144 = tpu.matmul %142, %143, %cst_26 {dimension_numbers = #tpu.dot_dimension_numbers<[1], [0], [0], [1], [0, 0, 1, 1], [], []>} : vector<256x32xbf16>, vector<32x32xbf16>, vector<256x32xf32> -> vector<256x32xf32>
    %c0_27 = arith.constant 0 : index
    %c0_28 = arith.constant 0 : index
    %c0_29 = arith.constant 0 : index
    %145 = vector.load %arg14[%c0_27, %c0_28, %c0_29] : memref<1x1x32xf32, #tpu.memory_space<vmem>>, vector<1x1x32xf32>
    %146 = vector.shape_cast %145 : vector<1x1x32xf32> to vector<1x32xf32>
    %147 = vector.broadcast %146 : vector<1x32xf32> to vector<256x32xf32>
    %148 = arith.addf %144, %147 : vector<256x32xf32>
    %cst_30 = arith.constant 0.000000e+00 : f32
    %149 = vector.broadcast %cst_30 : f32 to vector<256x32xf32>
    %150 = arith.maximumf %148, %149 : vector<256x32xf32>
    %c0_31 = arith.constant 0 : index
    %c0_32 = arith.constant 0 : index
    %c0_33 = arith.constant 0 : index
    %151 = vector.load %arg15[%c0_31, %c0_32, %c0_33] : memref<1x32x1xf32, #tpu.memory_space<vmem>>, vector<1x32x1xf32>
    %152 = vector.shape_cast %151 : vector<1x32x1xf32> to vector<32x1xf32>
    %153 = arith.truncf %150 : vector<256x32xf32> to vector<256x32xbf16>
    %154 = arith.truncf %152 : vector<32x1xf32> to vector<32x1xbf16>
    %cst_34 = arith.constant dense<0.000000e+00> : vector<256x1xf32>
    %155 = tpu.matmul %153, %154, %cst_34 {dimension_numbers = #tpu.dot_dimension_numbers<[1], [0], [0], [1], [0, 0, 1, 1], [], []>} : vector<256x32xbf16>, vector<32x1xbf16>, vector<256x1xf32> -> vector<256x1xf32>
    %c0_35 = arith.constant 0 : index
    %c0_36 = arith.constant 0 : index
    %156 = vector.load %arg19[%c0_35, %c0_36] : memref<16x256xbf16, #tpu.memory_space<vmem>>, vector<16x256xbf16>
    %157 = vector.broadcast %155 : vector<256x1xf32> to vector<256x3xf32>
    %158 = arith.mulf %157, %112 : vector<256x3xf32>
    %159 = tpu.concatenate %139, %158 in 1 : vector<256x32xf32>, vector<256x3xf32> -> vector<256x35xf32>
    %160 = arith.truncf %159 : vector<256x35xf32> to vector<256x35xbf16>
    %cst_37 = arith.constant dense<0.000000e+00> : vector<16x35xf32>
    %161 = tpu.matmul %156, %160, %cst_37 {dimension_numbers = #tpu.dot_dimension_numbers<[1], [0], [0], [1], [0, 0, 1, 1], [], []>} : vector<16x256xbf16>, vector<256x35xbf16>, vector<16x35xf32> -> vector<16x35xf32>
    %162 = vector.extract_strided_slice %161 {offsets = [0, 0], sizes = [16, 32], strides = [1, 1]} : vector<16x35xf32> to vector<16x32xf32>
    %163 = vector.extract_strided_slice %161 {offsets = [0, 32], sizes = [16, 3], strides = [1, 1]} : vector<16x35xf32> to vector<16x3xf32>
    %cst_38 = arith.constant 0.0666666701 : f32
    %164 = vector.broadcast %cst_38 : f32 to vector<16x3xf32>
    %165 = arith.mulf %163, %164 : vector<16x3xf32>
    %166 = arith.addf %4, %165 : vector<16x3xf32>
    %167 = tpu.concatenate %3, %162 in 1 : vector<16x32xf32>, vector<16x32xf32> -> vector<16x64xf32>
    %c0_39 = arith.constant 0 : index
    %c0_40 = arith.constant 0 : index
    %c0_41 = arith.constant 0 : index
    %168 = vector.load %arg9[%c0_39, %c0_40, %c0_41] : memref<1x64x32xf32, #tpu.memory_space<vmem>>, vector<1x64x32xf32>
    %169 = vector.shape_cast %168 : vector<1x64x32xf32> to vector<64x32xf32>
    %170 = arith.truncf %167 : vector<16x64xf32> to vector<16x64xbf16>
    %171 = arith.truncf %169 : vector<64x32xf32> to vector<64x32xbf16>
    %cst_42 = arith.constant dense<0.000000e+00> : vector<16x32xf32>
    %172 = tpu.matmul %170, %171, %cst_42 {dimension_numbers = #tpu.dot_dimension_numbers<[1], [0], [0], [1], [0, 0, 1, 1], [], []>} : vector<16x64xbf16>, vector<64x32xbf16>, vector<16x32xf32> -> vector<16x32xf32>
    %c0_43 = arith.constant 0 : index
    %c0_44 = arith.constant 0 : index
    %c0_45 = arith.constant 0 : index
    %173 = vector.load %arg10[%c0_43, %c0_44, %c0_45] : memref<1x1x32xf32, #tpu.memory_space<vmem>>, vector<1x1x32xf32>
    %174 = vector.shape_cast %173 : vector<1x1x32xf32> to vector<1x32xf32>
    %175 = vector.broadcast %174 : vector<1x32xf32> to vector<16x32xf32>
    %176 = arith.addf %172, %175 : vector<16x32xf32>
    %cst_46 = arith.constant 0.000000e+00 : f32
    %177 = vector.broadcast %cst_46 : f32 to vector<16x32xf32>
    %178 = arith.maximumf %176, %177 : vector<16x32xf32>
    %c0_47 = arith.constant 0 : index
    %c0_48 = arith.constant 0 : index
    %c0_49 = arith.constant 0 : index
    %179 = vector.load %arg11[%c0_47, %c0_48, %c0_49] : memref<1x32x32xf32, #tpu.memory_space<vmem>>, vector<1x32x32xf32>
    %180 = vector.shape_cast %179 : vector<1x32x32xf32> to vector<32x32xf32>
    %181 = arith.truncf %178 : vector<16x32xf32> to vector<16x32xbf16>
    %182 = arith.truncf %180 : vector<32x32xf32> to vector<32x32xbf16>
    %cst_50 = arith.constant dense<0.000000e+00> : vector<16x32xf32>
    %183 = tpu.matmul %181, %182, %cst_50 {dimension_numbers = #tpu.dot_dimension_numbers<[1], [0], [0], [1], [0, 0, 1, 1], [], []>} : vector<16x32xbf16>, vector<32x32xbf16>, vector<16x32xf32> -> vector<16x32xf32>
    %184 = arith.addf %3, %183 : vector<16x32xf32>
    %c0_51 = arith.constant 0 : index
    %c0_52 = arith.constant 0 : index
    %c0_53 = arith.constant 0 : index
    %185 = vector.load %arg12[%c0_51, %c0_52, %c0_53] : memref<1x1x32xf32, #tpu.memory_space<vmem>>, vector<1x1x32xf32>
    %186 = vector.shape_cast %185 : vector<1x1x32xf32> to vector<1x32xf32>
    %187 = vector.broadcast %186 : vector<1x32xf32> to vector<16x32xf32>
    %188 = arith.addf %184, %187 : vector<16x32xf32>
    %c0_54 = arith.constant 0 : index
    %c0_55 = arith.constant 0 : index
    %189 = vector.load %arg17[%c0_54, %c0_55] : memref<16x32xf32, #tpu.memory_space<vmem>>, vector<16x32xf32>
    tpu.vector_store %arg17[%c0_54, %c0_55], %188 {strides = array<i32>} : memref<16x32xf32, #tpu.memory_space<vmem>>, vector<16x32xf32>,
    %c0_56 = arith.constant 0 : index
    %c0_57 = arith.constant 0 : index
    %190 = vector.load %arg18[%c0_56, %c0_57] : memref<16x3xf32, #tpu.memory_space<vmem>>, vector<16x3xf32>
    tpu.vector_store %arg18[%c0_56, %c0_57], %166 {strides = array<i32>} : memref<16x3xf32, #tpu.memory_space<vmem>>, vector<16x3xf32>,
    %c2_i32 = arith.constant 2 : i32
    %191 = arith.cmpi eq, %arg1, %c2_i32 : i32
    %192 = arith.extui %191 : i1 to i32
    %c0_i32_58 = arith.constant 0 : i32
    %193 = arith.cmpi ne, %192, %c0_i32_58 : i32
    scf.if %193 {
      %cst_59 = arith.constant dense<0.000000e+00> : vector<32xf32>
      %194 = vector.multi_reduction <add>, %188, %cst_59 [0] : vector<16x32xf32> to vector<32xf32>
      %195 = vector.shape_cast %194 : vector<32xf32> to vector<1x32xf32>
      %cst_60 = arith.constant 0.000000e+00 : f32
      %196 = vector.broadcast %cst_60 : f32 to vector<16x29xf32>
      %197 = vector.shape_cast %195 : vector<1x32xf32> to vector<1x32xf32>
      %198 = vector.broadcast %197 : vector<1x32xf32> to vector<16x32xf32>
      %cst_61 = arith.constant 0.000000e+00 : f32
      %199 = vector.broadcast %cst_61 : f32 to vector<16x32xf32>
      %200 = tpu.concatenate %188, %166, %196, %198, %199 in 1 : vector<16x32xf32>, vector<16x3xf32>, vector<16x29xf32>, vector<16x32xf32>, vector<16x32xf32> -> vector<16x128xf32>
      %c0_62 = arith.constant 0 : index
      %c0_63 = arith.constant 0 : index
      %c0_64 = arith.constant 0 : index
      %201 = vector.load %arg16[%c0_62, %c0_63, %c0_64] : memref<1x16x128xf32, #tpu.memory_space<vmem>>, vector<1x16x128xf32>
      %202 = vector.shape_cast %201 : vector<1x16x128xf32> to vector<16x128xf32>
      %203 = vector.shape_cast %200 : vector<16x128xf32> to vector<1x16x128xf32>
      tpu.vector_store %arg16[%c0_62, %c0_63, %c0_64], %203 {strides = array<i32>} : memref<1x16x128xf32, #tpu.memory_space<vmem>>, vector<1x16x128xf32>,
    } else {
    }
    return
  }
  func.func @transform_0(%arg0: i32, %arg1: i32) -> (i32, i32, i32) {
    %c0_i32 = arith.constant 0 : i32
    %c0_i32_0 = arith.constant 0 : i32
    %c0_i32_1 = arith.constant 0 : i32
    return %arg0, %c0_i32, %c0_i32_0 : i32, i32, i32
  }
  func.func @transform_1(%arg0: i32, %arg1: i32) -> (i32, i32, i32) {
    %c0_i32 = arith.constant 0 : i32
    %c0_i32_0 = arith.constant 0 : i32
    %c0_i32_1 = arith.constant 0 : i32
    return %arg0, %c0_i32, %c0_i32_0 : i32, i32, i32
  }
  func.func @transform_2(%arg0: i32, %arg1: i32) -> (i32, i32, i32) {
    %c0_i32 = arith.constant 0 : i32
    %c0_i32_0 = arith.constant 0 : i32
    %c0_i32_1 = arith.constant 0 : i32
    return %arg1, %c0_i32, %c0_i32_0 : i32, i32, i32
  }
  func.func @transform_3(%arg0: i32, %arg1: i32) -> (i32, i32, i32) {
    %c0_i32 = arith.constant 0 : i32
    %c0_i32_0 = arith.constant 0 : i32
    %c0_i32_1 = arith.constant 0 : i32
    return %arg1, %c0_i32, %c0_i32_0 : i32, i32, i32
  }
  func.func @transform_4(%arg0: i32, %arg1: i32) -> (i32, i32, i32) {
    %c0_i32 = arith.constant 0 : i32
    %c0_i32_0 = arith.constant 0 : i32
    %c0_i32_1 = arith.constant 0 : i32
    return %arg1, %c0_i32, %c0_i32_0 : i32, i32, i32
  }
  func.func @transform_5(%arg0: i32, %arg1: i32) -> (i32, i32, i32) {
    %c0_i32 = arith.constant 0 : i32
    %c0_i32_0 = arith.constant 0 : i32
    %c0_i32_1 = arith.constant 0 : i32
    return %arg1, %c0_i32, %c0_i32_0 : i32, i32, i32
  }
  func.func @transform_6(%arg0: i32, %arg1: i32) -> (i32, i32, i32) {
    %c0_i32 = arith.constant 0 : i32
    %c0_i32_0 = arith.constant 0 : i32
    %c0_i32_1 = arith.constant 0 : i32
    return %arg1, %c0_i32, %c0_i32_0 : i32, i32, i32
  }
  func.func @transform_7(%arg0: i32, %arg1: i32) -> (i32, i32, i32) {
    %c0_i32 = arith.constant 0 : i32
    %c0_i32_0 = arith.constant 0 : i32
    %c0_i32_1 = arith.constant 0 : i32
    return %arg1, %c0_i32, %c0_i32_0 : i32, i32, i32
  }
  func.func @transform_8(%arg0: i32, %arg1: i32) -> (i32, i32, i32) {
    %c0_i32 = arith.constant 0 : i32
    %c0_i32_0 = arith.constant 0 : i32
    %c0_i32_1 = arith.constant 0 : i32
    return %arg1, %c0_i32, %c0_i32_0 : i32, i32, i32
  }
  func.func @transform_9(%arg0: i32, %arg1: i32) -> (i32, i32, i32) {
    %c0_i32 = arith.constant 0 : i32
    %c0_i32_0 = arith.constant 0 : i32
    %c0_i32_1 = arith.constant 0 : i32
    return %arg1, %c0_i32, %c0_i32_0 : i32, i32, i32
  }
  func.func @transform_10(%arg0: i32, %arg1: i32) -> (i32, i32, i32) {
    %c0_i32 = arith.constant 0 : i32
    %c0_i32_0 = arith.constant 0 : i32
    %c0_i32_1 = arith.constant 0 : i32
    return %arg1, %c0_i32, %c0_i32_0 : i32, i32, i32
  }
  func.func @transform_11(%arg0: i32, %arg1: i32) -> (i32, i32, i32) {
    %c0_i32 = arith.constant 0 : i32
    %c0_i32_0 = arith.constant 0 : i32
    %c0_i32_1 = arith.constant 0 : i32
    return %arg1, %c0_i32, %c0_i32_0 : i32, i32, i32
  }
  func.func @transform_12(%arg0: i32, %arg1: i32) -> (i32, i32, i32) {
    %c0_i32 = arith.constant 0 : i32
    %c0_i32_0 = arith.constant 0 : i32
    %c0_i32_1 = arith.constant 0 : i32
    return %arg1, %c0_i32, %c0_i32_0 : i32, i32, i32
  }
  func.func @transform_13(%arg0: i32, %arg1: i32) -> (i32, i32, i32) {
    %c0_i32 = arith.constant 0 : i32
    %c0_i32_0 = arith.constant 0 : i32
    %c0_i32_1 = arith.constant 0 : i32
    return %arg1, %c0_i32, %c0_i32_0 : i32, i32, i32
  }
  func.func @transform_14(%arg0: i32, %arg1: i32) -> (i32, i32, i32) {
    %c0_i32 = arith.constant 0 : i32
    %c0_i32_0 = arith.constant 0 : i32
    %c0_i32_1 = arith.constant 0 : i32
    return %arg0, %c0_i32, %c0_i32_0 : i32, i32, i32
  }
}

</mosaic_0001>

<llo_original>
// kernel: egnn_forward.1
$region0: #{egnn_forward.1}
  #allocation0 [shape = 'u32[]', space=smem, size = 0x4, offset = 0x4, fixed_abs, tag = 'smem constant byte address 0x4 - core index']
  #allocation1 [shape = 'u32[72,128]{1,0:T(1,128)}', space=vmem, size = 0x9000, scoped, tag = 'internal scratch']
  #allocation2 [shape = 'f32[16,32]{1,0:T(8,128)}', space=vmem, size = 0x2000, scoped, tag = 'scratch operand']
  #allocation3 [shape = 'f32[16,3]{1,0:T(8,128)}', space=vmem, size = 0x2000, scoped, tag = 'scratch operand']
  #allocation4 [shape = 'bf16[16,256]{1,0:T(8,128)(2,1)}', space=vmem, size = 0x2000, scoped, tag = 'scratch operand']
  %s0 = inlined_call_operand.vmem [shape: f32[2,16,32], index: 0, kind: input, shape index: {}]
  %s1 = inlined_call_operand.vmem [shape: f32[2,16,3], index: 1, kind: input, shape index: {}]
  %s2 = inlined_call_operand.vmem [shape: f32[3,32,64], index: 2, kind: input, shape index: {}]
  %s3 = inlined_call_operand.vmem [shape: f32[3,1,32], index: 3, kind: input, shape index: {}]
  %s4 = inlined_call_operand.vmem [shape: f32[3,1,32], index: 4, kind: input, shape index: {}]
  %s5 = inlined_call_operand.vmem [shape: f32[3,32,32], index: 5, kind: input, shape index: {}]
  %s6 = inlined_call_operand.vmem [shape: f32[3,1,32], index: 6, kind: input, shape index: {}]
  %s7 = inlined_call_operand.vmem [shape: f32[3,64,32], index: 7, kind: input, shape index: {}]
  %s8 = inlined_call_operand.vmem [shape: f32[3,1,32], index: 8, kind: input, shape index: {}]
  %s9 = inlined_call_operand.vmem [shape: f32[3,32,32], index: 9, kind: input, shape index: {}]
  %s10 = inlined_call_operand.vmem [shape: f32[3,1,32], index: 10, kind: input, shape index: {}]
  %s11 = inlined_call_operand.vmem [shape: f32[3,32,32], index: 11, kind: input, shape index: {}]
  %s12 = inlined_call_operand.vmem [shape: f32[3,1,32], index: 12, kind: input, shape index: {}]
  %s13 = inlined_call_operand.vmem [shape: f32[3,32,1], index: 13, kind: input, shape index: {}]
  %s14 = inlined_call_operand.vmem [shape: f32[2,16,128], index: 14, kind: output, shape index: {}]
  %s15 = sld [smem:[#allocation0]]
  $region97: #{egnn_forward.1} parent=0
    _
  %s17 = ssub.s32 1, %s15
  %s18 = scalar_select 0, %s17, %s15
  loop: start=0, step=1, limit=8
  $region2: #{egnn_forward.1} parent=0 // loop_pre_header
    _
  $region3: #{egnn_forward.1} parent=0 // loop_header
    %s20 = sphi 0, %s24
    %p21 = scmp.ge.s32.totalorder %s20, 8
    %s27 = sphi 0, %s39
    %s28 = sphi 0, %s35
    %s29 = sphi 0, %s27
    %s30 = sphi 0, %s28
    %s31 = sphi 0, %s29
    %s32 = sphi 0, %s30
    %s42 = sphi 0, %s44
    %s45 = sphi 0, %s42
    %s46 = sphi 0, %s45
    %s62 = sphi 0, %s46
    %s68 = sphi 0, %s70
    %s71 = sphi 0, %s68
    %s72 = sphi 0, %s71
    %s88 = sphi 0, %s72
    %s94 = sphi 0, %s96
    %s97 = sphi 0, %s94
    %s98 = sphi 0, %s97
    %s114 = sphi 0, %s98
    %s120 = sphi 0, %s122
    %s123 = sphi 0, %s120
    %s124 = sphi 0, %s123
    %s140 = sphi 0, %s124
    %s146 = sphi 0, %s148
    %s149 = sphi 0, %s146
    %s150 = sphi 0, %s149
    %s166 = sphi 0, %s150
    %s172 = sphi 0, %s174
    %s175 = sphi 0, %s172
    %s176 = sphi 0, %s175
    %s192 = sphi 0, %s176
    %s198 = sphi 0, %s200
    %s201 = sphi 0, %s198
    %s202 = sphi 0, %s201
    %s218 = sphi 0, %s202
    %s224 = sphi 0, %s226
    %s227 = sphi 0, %s224
    %s228 = sphi 0, %s227
    %s244 = sphi 0, %s228
    %s250 = sphi 0, %s252
    %s253 = sphi 0, %s250
    %s254 = sphi 0, %s253
    %s270 = sphi 0, %s254
    %s276 = sphi 0, %s278
    %s279 = sphi 0, %s276
    %s280 = sphi 0, %s279
    %s296 = sphi 0, %s280
    %s302 = sphi 0, %s304
    %s305 = sphi 0, %s302
    %s306 = sphi 0, %s305
    %s322 = sphi 0, %s306
    %s328 = sphi 0, %s330
    %s331 = sphi 0, %s328
    %s332 = sphi 0, %s331
    %s348 = sphi 0, %s332
    %s354 = sphi 0, %s356
    %s357 = sphi 0, %s354
    %s358 = sphi 0, %s357
    %s374 = sphi 0, %s358
    %s380 = sphi 0, %s382
    %s383 = sphi 0, %s380
    %s384 = sphi 0, %s383
    %s400 = sphi 0, %s384
    %s406 = sphi 0, %s408
    %s409 = sphi 0, %s406
    %s410 = sphi 0, %s409
    %s426 = sphi 0, %s410
  $region4: #{egnn_forward.1} parent=0 // loop_header_branch
    %23 = sbr.rel (%p21) target = $region8
  $region5: #{egnn_forward.1} parent=0 // loop_body
    %s25 = ssub.s32 %s20, 1
    %s26 = ssub.s32 %s20, 2
    %s33 = sadd.s32 1, %s28
    %p34 = scmp.ge.s32.totalorder %s33, 3
    %s35 = scalar_select %p34, 0, %s33
    %s36 = sadd.s32 1, %s27
    %s37 = scalar_select %p34, %s36, %s27
    %p38 = scmp.ge.s32.totalorder %s37, 2
    %s39 = scalar_select %p38, 0, %s37
    %s40 = ssub.s32 %s27, %s39
    %p41 = scmp.eq.s32.totalorder %s40, 0
    %s43 = sadd.s32 %s42, 1
    %s44 = scalar_select %p41, %s42, %s43
    %p47 = pneg %p41
    %p48 = scmp.eq.s32.totalorder %s20, 5
    %p49 = por %p47, %p48
    %p50 = scmp.ne.s32.totalorder %s42, %s45
    %p51 = scmp.eq.s32.totalorder %s20, 0
    %p52 = por %p50, %p51
    %p53 = scmp.ne.s32.totalorder %s42, %s45
    %p54 = scmp.eq.s32.totalorder %s25, 5
    %p55 = por %p53, %p54
    %p56 = scmp.ne.s32.totalorder %s45, %s46
    %p57 = scmp.eq.s32.totalorder %s25, 0
    %p58 = por %p56, %p57
    %p59 = scmp.ne.s32.totalorder %s45, %s46
    %p60 = scmp.eq.s32.totalorder %s26, 5
    %p61 = por %p59, %p60
    %p63 = scmp.ne.s32.totalorder %s46, %s62
    %p64 = scmp.eq.s32.totalorder %s26, 0
    %p65 = por %p63, %p64
    %s66 = ssub.s32 %s27, %s39
    %p67 = scmp.eq.s32.totalorder %s66, 0
    %s69 = sadd.s32 %s68, 1
    %s70 = scalar_select %p67, %s68, %s69
    %p73 = pneg %p67
    %p74 = scmp.eq.s32.totalorder %s20, 5
    %p75 = por %p73, %p74
    %p76 = scmp.ne.s32.totalorder %s68, %s71
    %p77 = scmp.eq.s32.totalorder %s20, 0
    %p78 = por %p76, %p77
    %p79 = scmp.ne.s32.totalorder %s68, %s71
    %p80 = scmp.eq.s32.totalorder %s25, 5
    %p81 = por %p79, %p80
    %p82 = scmp.ne.s32.totalorder %s71, %s72
    %p83 = scmp.eq.s32.totalorder %s25, 0
    %p84 = por %p82, %p83
    %p85 = scmp.ne.s32.totalorder %s71, %s72
    %p86 = scmp.eq.s32.totalorder %s26, 5
    %p87 = por %p85, %p86
    %p89 = scmp.ne.s32.totalorder %s72, %s88
    %p90 = scmp.eq.s32.totalorder %s26, 0
    %p91 = por %p89, %p90
    %s92 = ssub.s32 %s28, %s35
    %p93 = scmp.eq.s32.totalorder %s92, 0
    %s95 = sadd.s32 %s94, 1
    %s96 = scalar_select %p93, %s94, %s95
    %p99 = pneg %p93
    %p100 = scmp.eq.s32.totalorder %s20, 5
    %p101 = por %p99, %p100
    %p102 = scmp.ne.s32.totalorder %s94, %s97
    %p103 = scmp.eq.s32.totalorder %s20, 0
    %p104 = por %p102, %p103
    %p105 = scmp.ne.s32.totalorder %s94, %s97
    %p106 = scmp.eq.s32.totalorder %s25, 5
    %p107 = por %p105, %p106
    %p108 = scmp.ne.s32.totalorder %s97, %s98
    %p109 = scmp.eq.s32.totalorder %s25, 0
    %p110 = por %p108, %p109
    %p111 = scmp.ne.s32.totalorder %s97, %s98
    %p112 = scmp.eq.s32.totalorder %s26, 5
    %p113 = por %p111, %p112
    %p115 = scmp.ne.s32.totalorder %s98, %s114
    %p116 = scmp.eq.s32.totalorder %s26, 0
    %p117 = por %p115, %p116
    %s118 = ssub.s32 %s28, %s35
    %p119 = scmp.eq.s32.totalorder %s118, 0
    %s121 = sadd.s32 %s120, 1
    %s122 = scalar_select %p119, %s120, %s121
    %p125 = pneg %p119
    %p126 = scmp.eq.s32.totalorder %s20, 5
    %p127 = por %p125, %p126
    %p128 = scmp.ne.s32.totalorder %s120, %s123
    %p129 = scmp.eq.s32.totalorder %s20, 0
    %p130 = por %p128, %p129
    %p131 = scmp.ne.s32.totalorder %s120, %s123
    %p132 = scmp.eq.s32.totalorder %s25, 5
    %p133 = por %p131, %p132
    %p134 = scmp.ne.s32.totalorder %s123, %s124
    %p135 = scmp.eq.s32.totalorder %s25, 0
    %p136 = por %p134, %p135
    %p137 = scmp.ne.s32.totalorder %s123, %s124
    %p138 = scmp.eq.s32.totalorder %s26, 5
    %p139 = por %p137, %p138
    %p141 = scmp.ne.s32.totalorder %s124, %s140
    %p142 = scmp.eq.s32.totalorder %s26, 0
    %p143 = por %p141, %p142
    %s144 = ssub.s32 %s28, %s35
    %p145 = scmp.eq.s32.totalorder %s144, 0
    %s147 = sadd.s32 %s146, 1
    %s148 = scalar_select %p145, %s146, %s147
    %p151 = pneg %p145
    %p152 = scmp.eq.s32.totalorder %s20, 5
    %p153 = por %p151, %p152
    %p154 = scmp.ne.s32.totalorder %s146, %s149
    %p155 = scmp.eq.s32.totalorder %s20, 0
    %p156 = por %p154, %p155
    %p157 = scmp.ne.s32.totalorder %s146, %s149
    %p158 = scmp.eq.s32.totalorder %s25, 5
    %p159 = por %p157, %p158
    %p160 = scmp.ne.s32.totalorder %s149, %s150
    %p161 = scmp.eq.s32.totalorder %s25, 0
    %p162 = por %p160, %p161
    %p163 = scmp.ne.s32.totalorder %s149, %s150
    %p164 = scmp.eq.s32.totalorder %s26, 5
    %p165 = por %p163, %p164
    %p167 = scmp.ne.s32.totalorder %s150, %s166
    %p168 = scmp.eq.s32.totalorder %s26, 0
    %p169 = por %p167, %p168
    %s170 = ssub.s32 %s28, %s35
    %p171 = scmp.eq.s32.totalorder %s170, 0
    %s173 = sadd.s32 %s172, 1
    %s174 = scalar_select %p171, %s172, %s173
    %p177 = pneg %p171
    %p178 = scmp.eq.s32.totalorder %s20, 5
    %p179 = por %p177, %p178
    %p180 = scmp.ne.s32.totalorder %s172, %s175
    %p181 = scmp.eq.s32.totalorder %s20, 0
    %p182 = por %p180, %p181
    %p183 = scmp.ne.s32.totalorder %s172, %s175
    %p184 = scmp.eq.s32.totalorder %s25, 5
    %p185 = por %p183, %p184
    %p186 = scmp.ne.s32.totalorder %s175, %s176
    %p187 = scmp.eq.s32.totalorder %s25, 0
    %p188 = por %p186, %p187
    %p189 = scmp.ne.s32.totalorder %s175, %s176
    %p190 = scmp.eq.s32.totalorder %s26, 5
    %p191 = por %p189, %p190
    %p193 = scmp.ne.s32.totalorder %s176, %s192
    %p194 = scmp.eq.s32.totalorder %s26, 0
    %p195 = por %p193, %p194
    %s196 = ssub.s32 %s28, %s35
    %p197 = scmp.eq.s32.totalorder %s196, 0
    %s199 = sadd.s32 %s198, 1
    %s200 = scalar_select %p197, %s198, %s199
    %p203 = pneg %p197
    %p204 = scmp.eq.s32.totalorder %s20, 5
    %p205 = por %p203, %p204
    %p206 = scmp.ne.s32.totalorder %s198, %s201
    %p207 = scmp.eq.s32.totalorder %s20, 0
    %p208 = por %p206, %p207
    %p209 = scmp.ne.s32.totalorder %s198, %s201
    %p210 = scmp.eq.s32.totalorder %s25, 5
    %p211 = por %p209, %p210
    %p212 = scmp.ne.s32.totalorder %s201, %s202
    %p213 = scmp.eq.s32.totalorder %s25, 0
    %p214 = por %p212, %p213
    %p215 = scmp.ne.s32.totalorder %s201, %s202
    %p216 = scmp.eq.s32.totalorder %s26, 5
    %p217 = por %p215, %p216
    %p219 = scmp.ne.s32.totalorder %s202, %s218
    %p220 = scmp.eq.s32.totalorder %s26, 0
    %p221 = por %p219, %p220
    %s222 = ssub.s32 %s28, %s35
    %p223 = scmp.eq.s32.totalorder %s222, 0
    %s225 = sadd.s32 %s224, 1
    %s226 = scalar_select %p223, %s224, %s225
    %p229 = pneg %p223
    %p230 = scmp.eq.s32.totalorder %s20, 5
    %p231 = por %p229, %p230
    %p232 = scmp.ne.s32.totalorder %s224, %s227
    %p233 = scmp.eq.s32.totalorder %s20, 0
    %p234 = por %p232, %p233
    %p235 = scmp.ne.s32.totalorder %s224, %s227
    %p236 = scmp.eq.s32.totalorder %s25, 5
    %p237 = por %p235, %p236
    %p238 = scmp.ne.s32.totalorder %s227, %s228
    %p239 = scmp.eq.s32.totalorder %s25, 0
    %p240 = por %p238, %p239
    %p241 = scmp.ne.s32.totalorder %s227, %s228
    %p242 = scmp.eq.s32.totalorder %s26, 5
    %p243 = por %p241, %p242
    %p245 = scmp.ne.s32.totalorder %s228, %s244
    %p246 = scmp.eq.s32.totalorder %s26, 0
    %p247 = por %p245, %p246
    %s248 = ssub.s32 %s28, %s35
    %p249 = scmp.eq.s32.totalorder %s248, 0
    %s251 = sadd.s32 %s250, 1
    %s252 = scalar_select %p249, %s250, %s251
    %p255 = pneg %p249
    %p256 = scmp.eq.s32.totalorder %s20, 5
    %p257 = por %p255, %p256
    %p258 = scmp.ne.s32.totalorder %s250, %s253
    %p259 = scmp.eq.s32.totalorder %s20, 0
    %p260 = por %p258, %p259
    %p261 = scmp.ne.s32.totalorder %s250, %s253
    %p262 = scmp.eq.s32.totalorder %s25, 5
    %p263 = por %p261, %p262
    %p264 = scmp.ne.s32.totalorder %s253, %s254
    %p265 = scmp.eq.s32.totalorder %s25, 0
    %p266 = por %p264, %p265
    %p267 = scmp.ne.s32.totalorder %s253, %s254
    %p268 = scmp.eq.s32.totalorder %s26, 5
    %p269 = por %p267, %p268
    %p271 = scmp.ne.s32.totalorder %s254, %s270
    %p272 = scmp.eq.s32.totalorder %s26, 0
    %p273 = por %p271, %p272
    %s274 = ssub.s32 %s28, %s35
    %p275 = scmp.eq.s32.totalorder %s274, 0
    %s277 = sadd.s32 %s276, 1
    %s278 = scalar_select %p275, %s276, %s277
    %p281 = pneg %p275
    %p282 = scmp.eq.s32.totalorder %s20, 5
    %p283 = por %p281, %p282
    %p284 = scmp.ne.s32.totalorder %s276, %s279
    %p285 = scmp.eq.s32.totalorder %s20, 0
    %p286 = por %p284, %p285
    %p287 = scmp.ne.s32.totalorder %s276, %s279
    %p288 = scmp.eq.s32.totalorder %s25, 5
    %p289 = por %p287, %p288
    %p290 = scmp.ne.s32.totalorder %s279, %s280
    %p291 = scmp.eq.s32.totalorder %s25, 0
    %p292 = por %p290, %p291
    %p293 = scmp.ne.s32.totalorder %s279, %s280
    %p294 = scmp.eq.s32.totalorder %s26, 5
    %p295 = por %p293, %p294
    %p297 = scmp.ne.s32.totalorder %s280, %s296
    %p298 = scmp.eq.s32.totalorder %s26, 0
    %p299 = por %p297, %p298
    %s300 = ssub.s32 %s28, %s35
    %p301 = scmp.eq.s32.totalorder %s300, 0
    %s303 = sadd.s32 %s302, 1
    %s304 = scalar_select %p301, %s302, %s303
    %p307 = pneg %p301
    %p308 = scmp.eq.s32.totalorder %s20, 5
    %p309 = por %p307, %p308
    %p310 = scmp.ne.s32.totalorder %s302, %s305
    %p311 = scmp.eq.s32.totalorder %s20, 0
    %p312 = por %p310, %p311
    %p313 = scmp.ne.s32.totalorder %s302, %s305
    %p314 = scmp.eq.s32.totalorder %s25, 5
    %p315 = por %p313, %p314
    %p316 = scmp.ne.s32.totalorder %s305, %s306
    %p317 = scmp.eq.s32.totalorder %s25, 0
    %p318 = por %p316, %p317
    %p319 = scmp.ne.s32.totalorder %s305, %s306
    %p320 = scmp.eq.s32.totalorder %s26, 5
    %p321 = por %p319, %p320
    %p323 = scmp.ne.s32.totalorder %s306, %s322
    %p324 = scmp.eq.s32.totalorder %s26, 0
    %p325 = por %p323, %p324
    %s326 = ssub.s32 %s28, %s35
    %p327 = scmp.eq.s32.totalorder %s326, 0
    %s329 = sadd.s32 %s328, 1
    %s330 = scalar_select %p327, %s328, %s329
    %p333 = pneg %p327
    %p334 = scmp.eq.s32.totalorder %s20, 5
    %p335 = por %p333, %p334
    %p336 = scmp.ne.s32.totalorder %s328, %s331
    %p337 = scmp.eq.s32.totalorder %s20, 0
    %p338 = por %p336, %p337
    %p339 = scmp.ne.s32.totalorder %s328, %s331
    %p340 = scmp.eq.s32.totalorder %s25, 5
    %p341 = por %p339, %p340
    %p342 = scmp.ne.s32.totalorder %s331, %s332
    %p343 = scmp.eq.s32.totalorder %s25, 0
    %p344 = por %p342, %p343
    %p345 = scmp.ne.s32.totalorder %s331, %s332
    %p346 = scmp.eq.s32.totalorder %s26, 5
    %p347 = por %p345, %p346
    %p349 = scmp.ne.s32.totalorder %s332, %s348
    %p350 = scmp.eq.s32.totalorder %s26, 0
    %p351 = por %p349, %p350
    %s352 = ssub.s32 %s28, %s35
    %p353 = scmp.eq.s32.totalorder %s352, 0
    %s355 = sadd.s32 %s354, 1
    %s356 = scalar_select %p353, %s354, %s355
    %p359 = pneg %p353
    %p360 = scmp.eq.s32.totalorder %s20, 5
    %p361 = por %p359, %p360
    %p362 = scmp.ne.s32.totalorder %s354, %s357
    %p363 = scmp.eq.s32.totalorder %s20, 0
    %p364 = por %p362, %p363
    %p365 = scmp.ne.s32.totalorder %s354, %s357
    %p366 = scmp.eq.s32.totalorder %s25, 5
    %p367 = por %p365, %p366
    %p368 = scmp.ne.s32.totalorder %s357, %s358
    %p369 = scmp.eq.s32.totalorder %s25, 0
    %p370 = por %p368, %p369
    %p371 = scmp.ne.s32.totalorder %s357, %s358
    %p372 = scmp.eq.s32.totalorder %s26, 5
    %p373 = por %p371, %p372
    %p375 = scmp.ne.s32.totalorder %s358, %s374
    %p376 = scmp.eq.s32.totalorder %s26, 0
    %p377 = por %p375, %p376
    %s378 = ssub.s32 %s28, %s35
    %p379 = scmp.eq.s32.totalorder %s378, 0
    %s381 = sadd.s32 %s380, 1
    %s382 = scalar_select %p379, %s380, %s381
    %p385 = pneg %p379
    %p386 = scmp.eq.s32.totalorder %s20, 5
    %p387 = por %p385, %p386
    %p388 = scmp.ne.s32.totalorder %s380, %s383
    %p389 = scmp.eq.s32.totalorder %s20, 0
    %p390 = por %p388, %p389
    %p391 = scmp.ne.s32.totalorder %s380, %s383
    %p392 = scmp.eq.s32.totalorder %s25, 5
    %p393 = por %p391, %p392
    %p394 = scmp.ne.s32.totalorder %s383, %s384
    %p395 = scmp.eq.s32.totalorder %s25, 0
    %p396 = por %p394, %p395
    %p397 = scmp.ne.s32.totalorder %s383, %s384
    %p398 = scmp.eq.s32.totalorder %s26, 5
    %p399 = por %p397, %p398
    %p401 = scmp.ne.s32.totalorder %s384, %s400
    %p402 = scmp.eq.s32.totalorder %s26, 0
    %p403 = por %p401, %p402
    %s404 = ssub.s32 %s27, %s39
    %p405 = scmp.eq.s32.totalorder %s404, 0
    %s407 = sadd.s32 %s406, 1
    %s408 = scalar_select %p405, %s406, %s407
    %p411 = pneg %p405
    %p412 = scmp.eq.s32.totalorder %s20, 5
    %p413 = por %p411, %p412
    %p414 = scmp.ne.s32.totalorder %s406, %s409
    %p415 = scmp.eq.s32.totalorder %s20, 0
    %p416 = por %p414, %p415
    %p417 = scmp.ne.s32.totalorder %s406, %s409
    %p418 = scmp.eq.s32.totalorder %s25, 5
    %p419 = por %p417, %p418
    %p420 = scmp.ne.s32.totalorder %s409, %s410
    %p421 = scmp.eq.s32.totalorder %s25, 0
    %p422 = por %p420, %p421
    %p423 = scmp.ne.s32.totalorder %s409, %s410
    %p424 = scmp.eq.s32.totalorder %s26, 5
    %p425 = por %p423, %p424
    %p427 = scmp.ne.s32.totalorder %s410, %s426
    %p428 = scmp.eq.s32.totalorder %s26, 0
    %p429 = por %p427, %p428
    %p430 = scmp.le.s32.totalorder 1, %s20
    %p431 = scmp.lt.s32.totalorder %s20, 7
    %p432 = pnand %p430, %p431
    %p433 = pneg %p432
    // Predicated region
    $region9: #{egnn_forward.1} parent=5 // pred_check
      _
    $region10: #{egnn_forward.1} parent=5 // pred_check_branch
      %435 = sbr.rel (%p432) target = $region12
    $region11: #{egnn_forward.1} parent=5 // pred_region
      %s436 = ssub.s32 %s20, 1
    $region12: #{egnn_forward.1} parent=5 // pred_fallthru
      _
    %p437 = scmp.lt.s32.totalorder %s20, 6
    // Predicated region
    $region13: #{egnn_forward.1} parent=5 // pred_check
      %p438 = pneg %p437
    $region14: #{egnn_forward.1} parent=5 // pred_check_branch
      %440 = sbr.rel (%p438) target = $region16
    $region15: #{egnn_forward.1} parent=5 // pred_region
      // Predicated region
      $region17: #{egnn_forward.1} parent=15 // pred_check
        %p441 = pneg %p52
      $region18: #{egnn_forward.1} parent=15 // pred_check_branch
        %443 = sbr.rel (%p441) target = $region20
      $region19: #{egnn_forward.1} parent=15 // pred_region
        %p444 = scmp.lt.s32.totalorder %s27, 1
        %s445 = scalar_select %p444, %s27, 1
        %s446 = smul.addr %s445, 2
        %s447 = smul.addr %s446, 8
        %s448 = scalar_lea.vmem %s0, %s447
      $region20: #{egnn_forward.1} parent=15 // pred_fallthru
        _
      // Predicated region
      $region21: #{egnn_forward.1} parent=15 // pred_check
        %p449 = pneg %p78
      $region22: #{egnn_forward.1} parent=15 // pred_check_branch
        %451 = sbr.rel (%p449) target = $region24
      $region23: #{egnn_forward.1} parent=15 // pred_region
        %p452 = scmp.lt.s32.totalorder %s27, 1
        %s453 = scalar_select %p452, %s27, 1
        %s454 = smul.addr %s453, 2
        %s455 = smul.addr %s454, 8
        %s456 = scalar_lea.vmem %s1, %s455
      $region24: #{egnn_forward.1} parent=15 // pred_fallthru
        _
      // Predicated region
      $region25: #{egnn_forward.1} parent=15 // pred_check
        %p457 = pneg %p104
      $region26: #{egnn_forward.1} parent=15 // pred_check_branch
        %459 = sbr.rel (%p457) target = $region28
      $region27: #{egnn_forward.1} parent=15 // pred_region
        %p460 = scmp.lt.s32.totalorder %s28, 2
        %s461 = scalar_select %p460, %s28, 2
        %s462 = smul.addr %s461, 4
        %s463 = smul.addr %s462, 8
        %s464 = scalar_lea.vmem %s2, %s463
      $region28: #{egnn_forward.1} parent=15 // pred_fallthru
        _
      // Predicated region
      $region29: #{egnn_forward.1} parent=15 // pred_check
        %p465 = pneg %p130
      $region30: #{egnn_forward.1} parent=15 // pred_check_branch
        %467 = sbr.rel (%p465) target = $region32
      $region31: #{egnn_forward.1} parent=15 // pred_region
        %p468 = scmp.lt.s32.totalorder %s28, 2
        %s469 = scalar_select %p468, %s28, 2
        %s470 = scalar_lea.vmem %s3, %s469
      $region32: #{egnn_forward.1} parent=15 // pred_fallthru
        _
      // Predicated region
      $region33: #{egnn_forward.1} parent=15 // pred_check
        %p471 = pneg %p156
      $region34: #{egnn_forward.1} parent=15 // pred_check_branch
        %473 = sbr.rel (%p471) target = $region36
      $region35: #{egnn_forward.1} parent=15 // pred_region
        %p474 = scmp.lt.s32.totalorder %s28, 2
        %s475 = scalar_select %p474, %s28, 2
        %s476 = scalar_lea.vmem %s4, %s475
      $region36: #{egnn_forward.1} parent=15 // pred_fallthru
        _
      // Predicated region
      $region37: #{egnn_forward.1} parent=15 // pred_check
        %p477 = pneg %p182
      $region38: #{egnn_forward.1} parent=15 // pred_check_branch
        %479 = sbr.rel (%p477) target = $region40
      $region39: #{egnn_forward.1} parent=15 // pred_region
        %p480 = scmp.lt.s32.totalorder %s28, 2
        %s481 = scalar_select %p480, %s28, 2
        %s482 = smul.addr %s481, 4
        %s483 = smul.addr %s482, 8
        %s484 = scalar_lea.vmem %s5, %s483
      $region40: #{egnn_forward.1} parent=15 // pred_fallthru
        _
      // Predicated region
      $region41: #{egnn_forward.1} parent=15 // pred_check
        %p485 = pneg %p208
      $region42: #{egnn_forward.1} parent=15 // pred_check_branch
        %487 = sbr.rel (%p485) target = $region44
      $region43: #{egnn_forward.1} parent=15 // pred_region
        %p488 = scmp.lt.s32.totalorder %s28, 2
        %s489 = scalar_select %p488, %s28, 2
        %s490 = scalar_lea.vmem %s6, %s489
      $region44: #{egnn_forward.1} parent=15 // pred_fallthru
        _
      // Predicated region
      $region45: #{egnn_forward.1} parent=15 // pred_check
        %p491 = pneg %p234
      $region46: #{egnn_forward.1} parent=15 // pred_check_branch
        %493 = sbr.rel (%p491) target = $region48
      $region47: #{egnn_forward.1} parent=15 // pred_region
        %p494 = scmp.lt.s32.totalorder %s28, 2
        %s495 = scalar_select %p494, %s28, 2
        %s496 = smul.addr %s495, 8
        %s497 = smul.addr %s496, 8
        %s498 = scalar_lea.vmem %s7, %s497
      $region48: #{egnn_forward.1} parent=15 // pred_fallthru
        _
      // Predicated region
      $region49: #{egnn_forward.1} parent=15 // pred_check
        %p499 = pneg %p260
      $region50: #{egnn_forward.1} parent=15 // pred_check_branch
        %501 = sbr.rel (%p499) target = $region52
      $region51: #{egnn_forward.1} parent=15 // pred_region
        %p502 = scmp.lt.s32.totalorder %s28, 2
        %s503 = scalar_select %p502, %s28, 2
        %s504 = scalar_lea.vmem %s8, %s503
      $region52: #{egnn_forward.1} parent=15 // pred_fallthru
        _
      // Predicated region
      $region53: #{egnn_forward.1} parent=15 // pred_check
        %p505 = pneg %p286
      $region54: #{egnn_forward.1} parent=15 // pred_check_branch
        %507 = sbr.rel (%p505) target = $region56
      $region55: #{egnn_forward.1} parent=15 // pred_region
        %p508 = scmp.lt.s32.totalorder %s28, 2
        %s509 = scalar_select %p508, %s28, 2
        %s510 = smul.addr %s509, 4
        %s511 = smul.addr %s510, 8
        %s512 = scalar_lea.vmem %s9, %s511
      $region56: #{egnn_forward.1} parent=15 // pred_fallthru
        _
      // Predicated region
      $region57: #{egnn_forward.1} parent=15 // pred_check
        %p513 = pneg %p312
      $region58: #{egnn_forward.1} parent=15 // pred_check_branch
        %515 = sbr.rel (%p513) target = $region60
      $region59: #{egnn_forward.1} parent=15 // pred_region
        %p516 = scmp.lt.s32.totalorder %s28, 2
        %s517 = scalar_select %p516, %s28, 2
        %s518 = scalar_lea.vmem %s10, %s517
      $region60: #{egnn_forward.1} parent=15 // pred_fallthru
        _
      // Predicated region
      $region61: #{egnn_forward.1} parent=15 // pred_check
        %p519 = pneg %p338
      $region62: #{egnn_forward.1} parent=15 // pred_check_branch
        %521 = sbr.rel (%p519) target = $region64
      $region63: #{egnn_forward.1} parent=15 // pred_region
        %p522 = scmp.lt.s32.totalorder %s28, 2
        %s523 = scalar_select %p522, %s28, 2
        %s524 = smul.addr %s523, 4
        %s525 = smul.addr %s524, 8
        %s526 = scalar_lea.vmem %s11, %s525
      $region64: #{egnn_forward.1} parent=15 // pred_fallthru
        _
      // Predicated region
      $region65: #{egnn_forward.1} parent=15 // pred_check
        %p527 = pneg %p364
      $region66: #{egnn_forward.1} parent=15 // pred_check_branch
        %529 = sbr.rel (%p527) target = $region68
      $region67: #{egnn_forward.1} parent=15 // pred_region
        %p530 = scmp.lt.s32.totalorder %s28, 2
        %s531 = scalar_select %p530, %s28, 2
        %s532 = scalar_lea.vmem %s12, %s531
      $region68: #{egnn_forward.1} parent=15 // pred_fallthru
        _
      // Predicated region
      $region69: #{egnn_forward.1} parent=15 // pred_check
        %p533 = pneg %p390
      $region70: #{egnn_forward.1} parent=15 // pred_check_branch
        %535 = sbr.rel (%p533) target = $region72
      $region71: #{egnn_forward.1} parent=15 // pred_region
        %p536 = scmp.lt.s32.totalorder %s28, 2
        %s537 = scalar_select %p536, %s28, 2
        %s538 = smul.addr %s537, 4
        %s539 = smul.addr %s538, 8
        %s540 = scalar_lea.vmem %s13, %s539
      $region72: #{egnn_forward.1} parent=15 // pred_fallthru
        _
    $region16: #{egnn_forward.1} parent=5 // pred_fallthru
      _
    %p541 = scmp.le.s32.totalorder 1, %s20
    %p542 = scmp.lt.s32.totalorder %s20, 7
    %p543 = pnand %p541, %p542
    %p544 = pneg %p543
    // Predicated region
    $region73: #{egnn_forward.1} parent=5 // pred_check
      _
    $region74: #{egnn_forward.1} parent=5 // pred_check_branch
      %546 = sbr.rel (%p543) target = $region76
    $region75: #{egnn_forward.1} parent=5 // pred_region
      %s547 = ssub.s32 %s20, 1
      %p548 = scmp.lt.s32.totalorder %s29, 1
      %s549 = scalar_select %p548, %s29, 1
      %s550 = smul.addr %s549, 2
      %s551 = smul.addr %s550, 8
      %s552 = scalar_lea.vmem %s0, %s551
      %p553 = pneg %p58
      %p554 = pneg %p55
      %p555 = scmp.lt.s32.totalorder %s29, 1
      %s556 = scalar_select %p555, %s29, 1
      %s557 = smul.addr %s556, 2
      %s558 = smul.addr %s557, 8
      %s559 = scalar_lea.vmem %s1, %s558
      %p560 = pneg %p84
      %p561 = pneg %p81
      %p562 = scmp.lt.s32.totalorder %s30, 2
      %s563 = scalar_select %p562, %s30, 2
      %s564 = smul.addr %s563, 4
      %s565 = smul.addr %s564, 8
      %s566 = scalar_lea.vmem %s2, %s565
      %p567 = pneg %p110
      %p568 = pneg %p107
      %p569 = scmp.lt.s32.totalorder %s30, 2
      %s570 = scalar_select %p569, %s30, 2
      %s571 = scalar_lea.vmem %s3, %s570
      %p572 = pneg %p136
      %p573 = pneg %p133
      %p574 = scmp.lt.s32.totalorder %s30, 2
      %s575 = scalar_select %p574, %s30, 2
      %s576 = scalar_lea.vmem %s4, %s575
      %p577 = pneg %p162
      %p578 = pneg %p159
      %p579 = scmp.lt.s32.totalorder %s30, 2
      %s580 = scalar_select %p579, %s30, 2
      %s581 = smul.addr %s580, 4
      %s582 = smul.addr %s581, 8
      %s583 = scalar_lea.vmem %s5, %s582
      %p584 = pneg %p188
      %p585 = pneg %p185
      %p586 = scmp.lt.s32.totalorder %s30, 2
      %s587 = scalar_select %p586, %s30, 2
      %s588 = scalar_lea.vmem %s6, %s587
      %p589 = pneg %p214
      %p590 = pneg %p211
      %p591 = scmp.lt.s32.totalorder %s30, 2
      %s592 = scalar_select %p591, %s30, 2
      %s593 = smul.addr %s592, 8
      %s594 = smul.addr %s593, 8
      %s595 = scalar_lea.vmem %s7, %s594
      %p596 = pneg %p240
      %p597 = pneg %p237
      %p598 = scmp.lt.s32.totalorder %s30, 2
      %s599 = scalar_select %p598, %s30, 2
      %s600 = scalar_lea.vmem %s8, %s599
      %p601 = pneg %p266
      %p602 = pneg %p263
      %p603 = scmp.lt.s32.totalorder %s30, 2
      %s604 = scalar_select %p603, %s30, 2
      %s605 = smul.addr %s604, 4
      %s606 = smul.addr %s605, 8
      %s607 = scalar_lea.vmem %s9, %s606
      %p608 = pneg %p292
      %p609 = pneg %p289
      %p610 = scmp.lt.s32.totalorder %s30, 2
      %s611 = scalar_select %p610, %s30, 2
      %s612 = scalar_lea.vmem %s10, %s611
      %p613 = pneg %p318
      %p614 = pneg %p315
      %p615 = scmp.lt.s32.totalorder %s30, 2
      %s616 = scalar_select %p615, %s30, 2
      %s617 = smul.addr %s616, 4
      %s618 = smul.addr %s617, 8
      %s619 = scalar_lea.vmem %s11, %s618
      %p620 = pneg %p344
      %p621 = pneg %p341
      %p622 = scmp.lt.s32.totalorder %s30, 2
      %s623 = scalar_select %p622, %s30, 2
      %s624 = scalar_lea.vmem %s12, %s623
      %p625 = pneg %p370
      %p626 = pneg %p367
      %p627 = scmp.lt.s32.totalorder %s30, 2
      %s628 = scalar_select %p627, %s30, 2
      %s629 = smul.addr %s628, 4
      %s630 = smul.addr %s629, 8
      %s631 = scalar_lea.vmem %s13, %s630
      %p632 = pneg %p396
      %p633 = pneg %p393
      %p634 = pneg %p422
      %p635 = pneg %p419
      %p636 = scmp.lt.s32.totalorder %s29, 1
      %s637 = scalar_select %p636, %s29, 1
      %s638 = smul.addr %s637, 2
      %s639 = smul.addr %s638, 8
      %s640 = scalar_lea.vmem %s14, %s639
      %p641 = scmp.lt.s32.totalorder %s29, 1
      %s642 = scalar_select %p641, %s29, 1
      %s643 = smul.addr %s642, 2
      %s644 = smul.addr %s643, 8
      %s645 = scalar_lea.vmem %s0, %s644
      %p646 = scmp.lt.s32.totalorder %s29, 1
      %s647 = scalar_select %p646, %s29, 1
      %s648 = smul.addr %s647, 2
      %s649 = smul.addr %s648, 8
      %s650 = scalar_lea.vmem %s1, %s649
      %p651 = scmp.lt.s32.totalorder %s30, 2
      %s652 = scalar_select %p651, %s30, 2
      %s653 = smul.addr %s652, 4
      %s654 = smul.addr %s653, 8
      %s655 = scalar_lea.vmem %s2, %s654
      %p656 = scmp.lt.s32.totalorder %s30, 2
      %s657 = scalar_select %p656, %s30, 2
      %s658 = scalar_lea.vmem %s3, %s657
      %p659 = scmp.lt.s32.totalorder %s30, 2
      %s660 = scalar_select %p659, %s30, 2
      %s661 = scalar_lea.vmem %s4, %s660
      %p662 = scmp.lt.s32.totalorder %s30, 2
      %s663 = scalar_select %p662, %s30, 2
      %s664 = smul.addr %s663, 4
      %s665 = smul.addr %s664, 8
      %s666 = scalar_lea.vmem %s5, %s665
      %p667 = scmp.lt.s32.totalorder %s30, 2
      %s668 = scalar_select %p667, %s30, 2
      %s669 = scalar_lea.vmem %s6, %s668
      %p670 = scmp.lt.s32.totalorder %s30, 2
      %s671 = scalar_select %p670, %s30, 2
      %s672 = smul.addr %s671, 8
      %s673 = smul.addr %s672, 8
      %s674 = scalar_lea.vmem %s7, %s673
      %p675 = scmp.lt.s32.totalorder %s30, 2
      %s676 = scalar_select %p675, %s30, 2
      %s677 = scalar_lea.vmem %s8, %s676
      %p678 = scmp.lt.s32.totalorder %s30, 2
      %s679 = scalar_select %p678, %s30, 2
      %s680 = smul.addr %s679, 4
      %s681 = smul.addr %s680, 8
      %s682 = scalar_lea.vmem %s9, %s681
      %p683 = scmp.lt.s32.totalorder %s30, 2
      %s684 = scalar_select %p683, %s30, 2
      %s685 = scalar_lea.vmem %s10, %s684
      %p686 = scmp.lt.s32.totalorder %s30, 2
      %s687 = scalar_select %p686, %s30, 2
      %s688 = smul.addr %s687, 4
      %s689 = smul.addr %s688, 8
      %s690 = scalar_lea.vmem %s11, %s689
      %p691 = scmp.lt.s32.totalorder %s30, 2
      %s692 = scalar_select %p691, %s30, 2
      %s693 = scalar_lea.vmem %s12, %s692
      %p694 = scmp.lt.s32.totalorder %s30, 2
      %s695 = scalar_select %p694, %s30, 2
      %s696 = smul.addr %s695, 4
      %s697 = smul.addr %s696, 8
      %s698 = scalar_lea.vmem %s13, %s697
      %p699 = scmp.lt.s32.totalorder %s29, 1
      %s700 = scalar_select %p699, %s29, 1
      %s701 = smul.addr %s700, 2
      %s702 = smul.addr %s701, 8
      %s703 = scalar_lea.vmem %s14, %s702
      %p705 = scmp.eq.s32.totalorder %s30, 0
      // Predicated region
      $region77: #{egnn_forward.1} parent=75 // pred_check
        %p706 = pneg %p705
      $region78: #{egnn_forward.1} parent=75 // pred_check_branch
        %708 = sbr.rel (%p706) target = $region80
      $region79: #{egnn_forward.1} parent=75 // pred_region
        %v709 = vld [vmem:[%s645] sm:$0xff]
        %v710 = vld [vmem:[%s645 + $0x8] sm:$0xff]
        %vm711 = vcmask 261120
        %712 = vst.msk [vmem:[#allocation2] sm:$0xff] %vm711, %v709
        %713 = vst.msk [vmem:[#allocation2 + $0x8] sm:$0xff] %vm711, %v710
        %v714 = vld [vmem:[%s650] sm:$0xff]
        %v715 = vld [vmem:[%s650 + $0x8] sm:$0xff]
        %vm716 = vcmask 23552
        %717 = vst.msk [vmem:[#allocation3] sm:$0xff] %vm716, %v714
        %718 = vst.msk [vmem:[#allocation3 + $0x8] sm:$0xff] %vm716, %v715
        %v719 = vlaneseq
        %v720 = vand.u32 %v719, 127
        %v721 = vadd.s32 %v720, 128
        %v722 = vlaneseq
        %v723 = vshrl.u32 %v722, 7
        %v724 = vadd.s32 %v723, 8
        %v725 = vmul.u32 %v723, 16
        %v726 = vmul.u32 %v724, 16
        %vm727 = vcmp.ge.s32.totalorder %v720, %v725
        %vm728 = vcmp.ge.s32.totalorder %v721, %v725
        %vm729 = vcmp.ge.s32.totalorder %v720, %v726
        %vm730 = vcmp.ge.s32.totalorder %v721, %v726
        %v731 = vadd.s32 %v725, 16
        %v732 = vadd.s32 %v726, 16
        %vm733 = vcmp.lt.s32.totalorder %v720, %v731
        %vm734 = vcmp.lt.s32.totalorder %v721, %v731
        %vm735 = vcmp.lt.s32.totalorder %v720, %v732
        %vm736 = vcmp.lt.s32.totalorder %v721, %v732
        %vm737 = vmand %vm727, %vm733
        %vm738 = vmand %vm728, %vm734
        %vm739 = vmand %vm729, %vm735
        %vm740 = vmand %vm730, %vm736
        %v741 = vmul.u32 %v723, 17
        %v742 = vmul.u32 %v724, 17
        %vm743 = vcmp.ne.s32.totalorder %v720, %v741
        %vm744 = vcmp.ne.s32.totalorder %v721, %v741
        %vm745 = vcmp.ne.s32.totalorder %v720, %v742
        %vm746 = vcmp.ne.s32.totalorder %v721, %v742
        %vm747 = vmand %vm737, %vm743
        %vm748 = vmand %vm738, %vm744
        %vm749 = vmand %vm739, %vm745
        %vm750 = vmand %vm740, %vm746
        %v751 = vsel %vm747, 1, 0
        %v752 = vsel %vm748, 1, 0
        %v753 = vsel %vm749, 1, 0
        %v754 = vsel %vm750, 1, 0
        %v755 = vcvt.s32.f32 %v751
        %v756 = vcvt.s32.f32 %v752
        %v757 = vcvt.s32.f32 %v753
        %v758 = vcvt.s32.f32 %v754
        %v759 = vpack.c.bf16 %v756, %v755
        %v760 = vpack.c.bf16 %v758, %v757
        %761 = vst [vmem:[#allocation4] sm:$0xff] %v759
        %762 = vst [vmem:[#allocation4 + $0x8] sm:$0xff] %v760
      $region80: #{egnn_forward.1} parent=75 // pred_fallthru
        _
      %v763 = vld [vmem:[#allocation2] sm:$0xff]
      %v764 = vld [vmem:[#allocation2 + $0x8] sm:$0xff]
      %v765 = vld [vmem:[#allocation3] sm:$0xff]
      %v766 = vld [vmem:[#allocation3 + $0x8] sm:$0xff]
      %v767 = vld [vmem:[%s655] sm:$0xff]
      %v768 = vld [vmem:[%s655 + $0x8] sm:$0xff]
      %v769 = vld [vmem:[%s655 + $0x10] sm:$0xff]
      %v770 = vld [vmem:[%s655 + $0x18] sm:$0xff]
      %v771 = vpack.c.bf16 %v764, %v763
      %v772 = vpack.c.bf16 %v768, %v767
      %v773 = vpack.c.bf16 %v770, %v769
      %vm774 = vcmask 261120
      %v776 = vsel %vm774, %v771, 0
      %778 = vmatpush.bf16.msra.mxu0 0
      %779 = vmatpush.bf16.msra.mxu0 0
      %780 = vmatpush.bf16.msra.mxu0 0
      %781 = vmatpush.bf16.msra.mxu0 0
      %782 = vmatpush.bf16.msra.mxu0 0
      %783 = vmatpush.bf16.msra.mxu0 0
      %784 = vmatpush.bf16.msra.mxu0 %v773
      %785 = vmatpush.bf16.msra.mxu0 %v772
      %786 = vmatmul.bf16.gmra.mxu0 %v776
      %v787 = vpop.f32.mrf.mxu0
      %v788 = vadd.f32 0.0, %v787
      %v789 = vpop.f32.mrf.mxu0
      %v790 = vadd.f32 0.0, %v789
      %791 = vdwg.mxu0
      %v792 = vperm.slane %v788, 0
      %v793 = vperm.slane %v788, 1
      %v794 = vperm.slane %v788, 2
      %v795 = vperm.slane %v788, 3
      %v796 = vperm.slane %v788, 4
      %v797 = vperm.slane %v788, 5
      %v798 = vperm.slane %v788, 6
      %v799 = vperm.slane %v788, 7
      %v800 = vperm.slane %v790, 0
      %v801 = vperm.slane %v790, 1
      %v802 = vperm.slane %v790, 2
      %v803 = vperm.slane %v790, 3
      %v804 = vperm.slane %v790, 4
      %v805 = vperm.slane %v790, 5
      %v806 = vperm.slane %v790, 6
      %v807 = vperm.slane %v790, 7
      %v808 = vperm.slane %v765, 0
      %v809 = vperm.slane %v765, 1
      %v810 = vperm.slane %v765, 2
      %v811 = vperm.slane %v765, 3
      %v812 = vperm.slane %v765, 4
      %v813 = vperm.slane %v765, 5
      %v814 = vperm.slane %v765, 6
      %v815 = vperm.slane %v765, 7
      %v816 = vperm.slane %v766, 0
      %v817 = vperm.slane %v766, 1
      %v818 = vperm.slane %v766, 2
      %v819 = vperm.slane %v766, 3
      %v820 = vperm.slane %v766, 4
      %v821 = vperm.slane %v766, 5
      %v822 = vperm.slane %v766, 6
      %v823 = vperm.slane %v766, 7
      %v824 = vsub.f32 %v808, %v765
      %v825 = vsub.f32 %v808, %v766
      %v826 = vsub.f32 %v809, %v765
      %v827 = vsub.f32 %v809, %v766
      %v828 = vsub.f32 %v810, %v765
      %v829 = vsub.f32 %v810, %v766
      %v830 = vsub.f32 %v811, %v765
      %v831 = vsub.f32 %v811, %v766
      %v832 = vsub.f32 %v812, %v765
      %v833 = vsub.f32 %v812, %v766
      %v834 = vsub.f32 %v813, %v765
      %v835 = vsub.f32 %v813, %v766
      %v836 = vsub.f32 %v814, %v765
      %v837 = vsub.f32 %v814, %v766
      %v838 = vsub.f32 %v815, %v765
      %v839 = vsub.f32 %v815, %v766
      %v840 = vsub.f32 %v816, %v765
      %v841 = vsub.f32 %v816, %v766
      %v842 = vsub.f32 %v817, %v765
      %v843 = vsub.f32 %v817, %v766
      %v844 = vsub.f32 %v818, %v765
      %v845 = vsub.f32 %v818, %v766
      %v846 = vsub.f32 %v819, %v765
      %v847 = vsub.f32 %v819, %v766
      %v848 = vsub.f32 %v820, %v765
      %v849 = vsub.f32 %v820, %v766
      %v850 = vsub.f32 %v821, %v765
      %v851 = vsub.f32 %v821, %v766
      %v852 = vsub.f32 %v822, %v765
      %v853 = vsub.f32 %v822, %v766
      %v854 = vsub.f32 %v823, %v765
      %v855 = vsub.f32 %v823, %v766
      %v856 = vmul.f32 %v824, %v824
      %v857 = vmul.f32 %v825, %v825
      %v858 = vmul.f32 %v826, %v826
      %v859 = vmul.f32 %v827, %v827
      %v860 = vmul.f32 %v828, %v828
      %v861 = vmul.f32 %v829, %v829
      %v862 = vmul.f32 %v830, %v830
      %v863 = vmul.f32 %v831, %v831
      %v864 = vmul.f32 %v832, %v832
      %v865 = vmul.f32 %v833, %v833
      %v866 = vmul.f32 %v834, %v834
      %v867 = vmul.f32 %v835, %v835
      %v868 = vmul.f32 %v836, %v836
      %v869 = vmul.f32 %v837, %v837
      %v870 = vmul.f32 %v838, %v838
      %v871 = vmul.f32 %v839, %v839
      %v872 = vmul.f32 %v840, %v840
      %v873 = vmul.f32 %v841, %v841
      %v874 = vmul.f32 %v842, %v842
      %v875 = vmul.f32 %v843, %v843
      %v876 = vmul.f32 %v844, %v844
      %v877 = vmul.f32 %v845, %v845
      %v878 = vmul.f32 %v846, %v846
      %v879 = vmul.f32 %v847, %v847
      %v880 = vmul.f32 %v848, %v848
      %v881 = vmul.f32 %v849, %v849
      %v882 = vmul.f32 %v850, %v850
      %v883 = vmul.f32 %v851, %v851
      %v884 = vmul.f32 %v852, %v852
      %v885 = vmul.f32 %v853, %v853
      %v886 = vmul.f32 %v854, %v854
      %v887 = vmul.f32 %v855, %v855
      %vm888 = vcmask 23552
      %v889 = vsel %vm888, %v856, 0.0
      %890 = vadd.xlane.f32.xlu0 %v889
      %v891 = vpop.xlane.xlu0 %890
      %v892 = vsel %vm888, %v857, 0.0
      %893 = vadd.xlane.f32.xlu0 %v892
      %v894 = vpop.xlane.xlu0 %893
      %v895 = vsel %vm888, %v858, 0.0
      %896 = vadd.xlane.f32.xlu0 %v895
      %v897 = vpop.xlane.xlu0 %896
      %v898 = vsel %vm888, %v859, 0.0
      %899 = vadd.xlane.f32.xlu0 %v898
      %v900 = vpop.xlane.xlu0 %899
      %v901 = vsel %vm888, %v860, 0.0
      %902 = vadd.xlane.f32.xlu0 %v901
      %v903 = vpop.xlane.xlu0 %902
      %v904 = vsel %vm888, %v861, 0.0
      %905 = vadd.xlane.f32.xlu0 %v904
      %v906 = vpop.xlane.xlu0 %905
      %v907 = vsel %vm888, %v862, 0.0
      %908 = vadd.xlane.f32.xlu0 %v907
      %v909 = vpop.xlane.xlu0 %908
      %v910 = vsel %vm888, %v863, 0.0
      %911 = vadd.xlane.f32.xlu0 %v910
      %v912 = vpop.xlane.xlu0 %911
      %v913 = vsel %vm888, %v864, 0.0
      %914 = vadd.xlane.f32.xlu0 %v913
      %v915 = vpop.xlane.xlu0 %914
      %v916 = vsel %vm888, %v865, 0.0
      %917 = vadd.xlane.f32.xlu0 %v916
      %v918 = vpop.xlane.xlu0 %917
      %v919 = vsel %vm888, %v866, 0.0
      %920 = vadd.xlane.f32.xlu0 %v919
      %v921 = vpop.xlane.xlu0 %920
      %v922 = vsel %vm888, %v867, 0.0
      %923 = vadd.xlane.f32.xlu0 %v922
      %v924 = vpop.xlane.xlu0 %923
      %v925 = vsel %vm888, %v868, 0.0
      %926 = vadd.xlane.f32.xlu0 %v925
      %v927 = vpop.xlane.xlu0 %926
      %v928 = vsel %vm888, %v869, 0.0
      %929 = vadd.xlane.f32.xlu0 %v928
      %v930 = vpop.xlane.xlu0 %929
      %v931 = vsel %vm888, %v870, 0.0
      %932 = vadd.xlane.f32.xlu0 %v931
      %v933 = vpop.xlane.xlu0 %932
      %v934 = vsel %vm888, %v871, 0.0
      %935 = vadd.xlane.f32.xlu0 %v934
      %v936 = vpop.xlane.xlu0 %935
      %v937 = vsel %vm888, %v872, 0.0
      %938 = vadd.xlane.f32.xlu0 %v937
      %v939 = vpop.xlane.xlu0 %938
      %v940 = vsel %vm888, %v873, 0.0
      %941 = vadd.xlane.f32.xlu0 %v940
      %v942 = vpop.xlane.xlu0 %941
      %v943 = vsel %vm888, %v874, 0.0
      %944 = vadd.xlane.f32.xlu0 %v943
      %v945 = vpop.xlane.xlu0 %944
      %v946 = vsel %vm888, %v875, 0.0
      %947 = vadd.xlane.f32.xlu0 %v946
      %v948 = vpop.xlane.xlu0 %947
      %v949 = vsel %vm888, %v876, 0.0
      %950 = vadd.xlane.f32.xlu0 %v949
      %v951 = vpop.xlane.xlu0 %950
      %v952 = vsel %vm888, %v877, 0.0
      %953 = vadd.xlane.f32.xlu0 %v952
      %v954 = vpop.xlane.xlu0 %953
      %v955 = vsel %vm888, %v878, 0.0
      %956 = vadd.xlane.f32.xlu0 %v955
      %v957 = vpop.xlane.xlu0 %956
      %v958 = vsel %vm888, %v879, 0.0
      %959 = vadd.xlane.f32.xlu0 %v958
      %v960 = vpop.xlane.xlu0 %959
      %v961 = vsel %vm888, %v880, 0.0
      %962 = vadd.xlane.f32.xlu0 %v961
      %v963 = vpop.xlane.xlu0 %962
      %v964 = vsel %vm888, %v881, 0.0
      %965 = vadd.xlane.f32.xlu0 %v964
      %v966 = vpop.xlane.xlu0 %965
      %v967 = vsel %vm888, %v882, 0.0
      %968 = vadd.xlane.f32.xlu0 %v967
      %v969 = vpop.xlane.xlu0 %968
      %v970 = vsel %vm888, %v883, 0.0
      %971 = vadd.xlane.f32.xlu0 %v970
      %v972 = vpop.xlane.xlu0 %971
      %v973 = vsel %vm888, %v884, 0.0
      %974 = vadd.xlane.f32.xlu0 %v973
      %v975 = vpop.xlane.xlu0 %974
      %v976 = vsel %vm888, %v885, 0.0
      %977 = vadd.xlane.f32.xlu0 %v976
      %v978 = vpop.xlane.xlu0 %977
      %v979 = vsel %vm888, %v886, 0.0
      %980 = vadd.xlane.f32.xlu0 %v979
      %v981 = vpop.xlane.xlu0 %980
      %v982 = vsel %vm888, %v887, 0.0
      %983 = vadd.xlane.f32.xlu0 %v982
      %v984 = vpop.xlane.xlu0 %983
      %987 = vrot.lane.b32.xlu0 %v788, 96
      %v988 = vpop.permute.xlu0 %987
      %989 = vrot.lane.b32.xlu0 %v790, 96
      %v990 = vpop.permute.xlu0 %989
      %v993 = vadd.f32 %v792, %v988
      %v994 = vadd.f32 %v792, %v990
      %v995 = vadd.f32 %v793, %v988
      %v996 = vadd.f32 %v793, %v990
      %v997 = vadd.f32 %v794, %v988
      %v998 = vadd.f32 %v794, %v990
      %v999 = vadd.f32 %v795, %v988
      %v1000 = vadd.f32 %v795, %v990
      %v1001 = vadd.f32 %v796, %v988
      %v1002 = vadd.f32 %v796, %v990
      %v1003 = vadd.f32 %v797, %v988
      %v1004 = vadd.f32 %v797, %v990
      %v1005 = vadd.f32 %v798, %v988
      %v1006 = vadd.f32 %v798, %v990
      %v1007 = vadd.f32 %v799, %v988
      %v1008 = vadd.f32 %v799, %v990
      %v1009 = vadd.f32 %v800, %v988
      %v1010 = vadd.f32 %v800, %v990
      %v1011 = vadd.f32 %v801, %v988
      %v1012 = vadd.f32 %v801, %v990
      %v1013 = vadd.f32 %v802, %v988
      %v1014 = vadd.f32 %v802, %v990
      %v1015 = vadd.f32 %v803, %v988
      %v1016 = vadd.f32 %v803, %v990
      %v1017 = vadd.f32 %v804, %v988
      %v1018 = vadd.f32 %v804, %v990
      %v1019 = vadd.f32 %v805, %v988
      %v1020 = vadd.f32 %v805, %v990
      %v1021 = vadd.f32 %v806, %v988
      %v1022 = vadd.f32 %v806, %v990
      %v1023 = vadd.f32 %v807, %v988
      %v1024 = vadd.f32 %v807, %v990
      %v1025 = vld [vmem:[%s658] sm:$0x1]
      %v1027 = vperm.slane %v1025, 0
      %v1029 = vmul.f32 %v891, %v1027
      %v1030 = vmul.f32 %v894, %v1027
      %v1031 = vmul.f32 %v897, %v1027
      %v1032 = vmul.f32 %v900, %v1027
      %v1033 = vmul.f32 %v903, %v1027
      %v1034 = vmul.f32 %v906, %v1027
      %v1035 = vmul.f32 %v909, %v1027
      %v1036 = vmul.f32 %v912, %v1027
      %v1037 = vmul.f32 %v915, %v1027
      %v1038 = vmul.f32 %v918, %v1027
      %v1039 = vmul.f32 %v921, %v1027
      %v1040 = vmul.f32 %v924, %v1027
      %v1041 = vmul.f32 %v927, %v1027
      %v1042 = vmul.f32 %v930, %v1027
      %v1043 = vmul.f32 %v933, %v1027
      %v1044 = vmul.f32 %v936, %v1027
      %v1045 = vmul.f32 %v939, %v1027
      %v1046 = vmul.f32 %v942, %v1027
      %v1047 = vmul.f32 %v945, %v1027
      %v1048 = vmul.f32 %v948, %v1027
      %v1049 = vmul.f32 %v951, %v1027
      %v1050 = vmul.f32 %v954, %v1027
      %v1051 = vmul.f32 %v957, %v1027
      %v1052 = vmul.f32 %v960, %v1027
      %v1053 = vmul.f32 %v963, %v1027
      %v1054 = vmul.f32 %v966, %v1027
      %v1055 = vmul.f32 %v969, %v1027
      %v1056 = vmul.f32 %v972, %v1027
      %v1057 = vmul.f32 %v975, %v1027
      %v1058 = vmul.f32 %v978, %v1027
      %v1059 = vmul.f32 %v981, %v1027
      %v1060 = vmul.f32 %v984, %v1027
      %v1061 = vadd.f32 %v993, %v1029
      %v1062 = vadd.f32 %v994, %v1030
      %v1063 = vadd.f32 %v995, %v1031
      %v1064 = vadd.f32 %v996, %v1032
      %v1065 = vadd.f32 %v997, %v1033
      %v1066 = vadd.f32 %v998, %v1034
      %v1067 = vadd.f32 %v999, %v1035
      %v1068 = vadd.f32 %v1000, %v1036
      %v1069 = vadd.f32 %v1001, %v1037
      %v1070 = vadd.f32 %v1002, %v1038
      %v1071 = vadd.f32 %v1003, %v1039
      %v1072 = vadd.f32 %v1004, %v1040
      %v1073 = vadd.f32 %v1005, %v1041
      %v1074 = vadd.f32 %v1006, %v1042
      %v1075 = vadd.f32 %v1007, %v1043
      %v1076 = vadd.f32 %v1008, %v1044
      %v1077 = vadd.f32 %v1009, %v1045
      %v1078 = vadd.f32 %v1010, %v1046
      %v1079 = vadd.f32 %v1011, %v1047
      %v1080 = vadd.f32 %v1012, %v1048
      %v1081 = vadd.f32 %v1013, %v1049
      %v1082 = vadd.f32 %v1014, %v1050
      %v1083 = vadd.f32 %v1015, %v1051
      %v1084 = vadd.f32 %v1016, %v1052
      %v1085 = vadd.f32 %v1017, %v1053
      %v1086 = vadd.f32 %v1018, %v1054
      %v1087 = vadd.f32 %v1019, %v1055
      %v1088 = vadd.f32 %v1020, %v1056
      %v1089 = vadd.f32 %v1021, %v1057
      %v1090 = vadd.f32 %v1022, %v1058
      %v1091 = vadd.f32 %v1023, %v1059
      %v1092 = vadd.f32 %v1024, %v1060
      %v1093 = vld [vmem:[%s661] sm:$0x1]
      %v1095 = vperm.slane %v1093, 0
      %v1097 = vadd.f32 %v1061, %v1095
      %v1098 = vadd.f32 %v1062, %v1095
      %v1099 = vadd.f32 %v1063, %v1095
      %v1100 = vadd.f32 %v1064, %v1095
      %v1101 = vadd.f32 %v1065, %v1095
      %v1102 = vadd.f32 %v1066, %v1095
      %v1103 = vadd.f32 %v1067, %v1095
      %v1104 = vadd.f32 %v1068, %v1095
      %v1105 = vadd.f32 %v1069, %v1095
      %v1106 = vadd.f32 %v1070, %v1095
      %v1107 = vadd.f32 %v1071, %v1095
      %v1108 = vadd.f32 %v1072, %v1095
      %v1109 = vadd.f32 %v1073, %v1095
      %v1110 = vadd.f32 %v1074, %v1095
      %v1111 = vadd.f32 %v1075, %v1095
      %v1112 = vadd.f32 %v1076, %v1095
      %v1113 = vadd.f32 %v1077, %v1095
      %v1114 = vadd.f32 %v1078, %v1095
      %v1115 = vadd.f32 %v1079, %v1095
      %v1116 = vadd.f32 %v1080, %v1095
      %v1117 = vadd.f32 %v1081, %v1095
      %v1118 = vadd.f32 %v1082, %v1095
      %v1119 = vadd.f32 %v1083, %v1095
      %v1120 = vadd.f32 %v1084, %v1095
      %v1121 = vadd.f32 %v1085, %v1095
      %v1122 = vadd.f32 %v1086, %v1095
      %v1123 = vadd.f32 %v1087, %v1095
      %v1124 = vadd.f32 %v1088, %v1095
      %v1125 = vadd.f32 %v1089, %v1095
      %v1126 = vadd.f32 %v1090, %v1095
      %v1127 = vadd.f32 %v1091, %v1095
      %v1128 = vadd.f32 %v1092, %v1095
      %v1129 = vmax.f32 %v1097, 0.0
      %v1130 = vmax.f32 %v1098, 0.0
      %v1131 = vmax.f32 %v1099, 0.0
      %v1132 = vmax.f32 %v1100, 0.0
      %v1133 = vmax.f32 %v1101, 0.0
      %v1134 = vmax.f32 %v1102, 0.0
      %v1135 = vmax.f32 %v1103, 0.0
      %v1136 = vmax.f32 %v1104, 0.0
      %v1137 = vmax.f32 %v1105, 0.0
      %v1138 = vmax.f32 %v1106, 0.0
      %v1139 = vmax.f32 %v1107, 0.0
      %v1140 = vmax.f32 %v1108, 0.0
      %v1141 = vmax.f32 %v1109, 0.0
      %v1142 = vmax.f32 %v1110, 0.0
      %v1143 = vmax.f32 %v1111, 0.0
      %v1144 = vmax.f32 %v1112, 0.0
      %v1145 = vmax.f32 %v1113, 0.0
      %v1146 = vmax.f32 %v1114, 0.0
      %v1147 = vmax.f32 %v1115, 0.0
      %v1148 = vmax.f32 %v1116, 0.0
      %v1149 = vmax.f32 %v1117, 0.0
      %v1150 = vmax.f32 %v1118, 0.0
      %v1151 = vmax.f32 %v1119, 0.0
      %v1152 = vmax.f32 %v1120, 0.0
      %v1153 = vmax.f32 %v1121, 0.0
      %v1154 = vmax.f32 %v1122, 0.0
      %v1155 = vmax.f32 %v1123, 0.0
      %v1156 = vmax.f32 %v1124, 0.0
      %v1157 = vmax.f32 %v1125, 0.0
      %v1158 = vmax.f32 %v1126, 0.0
      %v1159 = vmax.f32 %v1127, 0.0
      %v1160 = vmax.f32 %v1128, 0.0
      %v1161 = vld [vmem:[%s666] sm:$0xff]
      %v1162 = vld [vmem:[%s666 + $0x8] sm:$0xff]
      %v1163 = vld [vmem:[%s666 + $0x10] sm:$0xff]
      %v1164 = vld [vmem:[%s666 + $0x18] sm:$0xff]
      %v1165 = vpack.c.bf16 %v1130, %v1129
      %v1166 = vpack.c.bf16 %v1132, %v1131
      %v1167 = vpack.c.bf16 %v1134, %v1133
      %v1168 = vpack.c.bf16 %v1136, %v1135
      %v1169 = vpack.c.bf16 %v1138, %v1137
      %v1170 = vpack.c.bf16 %v1140, %v1139
      %v1171 = vpack.c.bf16 %v1142, %v1141
      %v1172 = vpack.c.bf16 %v1144, %v1143
      %v1173 = vpack.c.bf16 %v1146, %v1145
      %v1174 = vpack.c.bf16 %v1148, %v1147
      %v1175 = vpack.c.bf16 %v1150, %v1149
      %v1176 = vpack.c.bf16 %v1152, %v1151
      %v1177 = vpack.c.bf16 %v1154, %v1153
      %v1178 = vpack.c.bf16 %v1156, %v1155
      %v1179 = vpack.c.bf16 %v1158, %v1157
      %v1180 = vpack.c.bf16 %v1160, %v1159
      %v1181 = vpack.c.bf16 %v1162, %v1161
      %v1182 = vpack.c.bf16 %v1164, %v1163
      %v1183 = vld [vmem:[%s669] sm:$0x1]
      %v1185 = vperm.slane %v1183, 0
      %v1188 = vsel %vm774, %v1165, 0
      %v1191 = vsel %vm774, %v1166, 0
      %v1194 = vsel %vm774, %v1167, 0
      %v1197 = vsel %vm774, %v1168, 0
      %v1200 = vsel %vm774, %v1169, 0
      %v1203 = vsel %vm774, %v1170, 0
      %v1206 = vsel %vm774, %v1171, 0
      %v1209 = vsel %vm774, %v1172, 0
      %v1212 = vsel %vm774, %v1173, 0
      %v1215 = vsel %vm774, %v1174, 0
      %v1218 = vsel %vm774, %v1175, 0
      %v1221 = vsel %vm774, %v1176, 0
      %v1224 = vsel %vm774, %v1177, 0
      %v1227 = vsel %vm774, %v1178, 0
      %v1230 = vsel %vm774, %v1179, 0
      %v1233 = vsel %vm774, %v1180, 0
      %1235 = vmatpush.bf16.msra.mxu0 0
      %1236 = vmatpush.bf16.msra.mxu0 0
      %1237 = vmatpush.bf16.msra.mxu0 0
      %1238 = vmatpush.bf16.msra.mxu0 0
      %1239 = vmatpush.bf16.msra.mxu0 0
      %1240 = vmatpush.bf16.msra.mxu0 0
      %1241 = vmatpush.bf16.msra.mxu0 %v1182
      %1242 = vmatpush.bf16.msra.mxu0 %v1181
      %1243 = vmatmul.bf16.gmra.mxu0 %v1188
      %v1244 = vpop.f32.mrf.mxu0
      %v1245 = vadd.f32 %v1185, %v1244
      %v1246 = vpop.f32.mrf.mxu0
      %v1247 = vadd.f32 %v1185, %v1246
      %1248 = vmatmul.bf16.gmra.mxu0 %v1191
      %v1249 = vpop.f32.mrf.mxu0
      %v1250 = vadd.f32 %v1185, %v1249
      %v1251 = vpop.f32.mrf.mxu0
      %v1252 = vadd.f32 %v1185, %v1251
      %1253 = vmatmul.bf16.gmra.mxu0 %v1194
      %v1254 = vpop.f32.mrf.mxu0
      %v1255 = vadd.f32 %v1185, %v1254
      %v1256 = vpop.f32.mrf.mxu0
      %v1257 = vadd.f32 %v1185, %v1256
      %1258 = vmatmul.bf16.gmra.mxu0 %v1197
      %v1259 = vpop.f32.mrf.mxu0
      %v1260 = vadd.f32 %v1185, %v1259
      %v1261 = vpop.f32.mrf.mxu0
      %v1262 = vadd.f32 %v1185, %v1261
      %1263 = vmatmul.bf16.gmra.mxu0 %v1200
      %v1264 = vpop.f32.mrf.mxu0
      %v1265 = vadd.f32 %v1185, %v1264
      %v1266 = vpop.f32.mrf.mxu0
      %v1267 = vadd.f32 %v1185, %v1266
      %1268 = vmatmul.bf16.gmra.mxu0 %v1203
      %v1269 = vpop.f32.mrf.mxu0
      %v1270 = vadd.f32 %v1185, %v1269
      %v1271 = vpop.f32.mrf.mxu0
      %v1272 = vadd.f32 %v1185, %v1271
      %1273 = vmatmul.bf16.gmra.mxu0 %v1206
      %v1274 = vpop.f32.mrf.mxu0
      %v1275 = vadd.f32 %v1185, %v1274
      %v1276 = vpop.f32.mrf.mxu0
      %v1277 = vadd.f32 %v1185, %v1276
      %1278 = vmatmul.bf16.gmra.mxu0 %v1209
      %v1279 = vpop.f32.mrf.mxu0
      %v1280 = vadd.f32 %v1185, %v1279
      %v1281 = vpop.f32.mrf.mxu0
      %v1282 = vadd.f32 %v1185, %v1281
      %1283 = vmatmul.bf16.gmra.mxu0 %v1212
      %v1284 = vpop.f32.mrf.mxu0
      %v1285 = vadd.f32 %v1185, %v1284
      %v1286 = vpop.f32.mrf.mxu0
      %v1287 = vadd.f32 %v1185, %v1286
      %1288 = vmatmul.bf16.gmra.mxu0 %v1215
      %v1289 = vpop.f32.mrf.mxu0
      %v1290 = vadd.f32 %v1185, %v1289
      %v1291 = vpop.f32.mrf.mxu0
      %v1292 = vadd.f32 %v1185, %v1291
      %1293 = vmatmul.bf16.gmra.mxu0 %v1218
      %v1294 = vpop.f32.mrf.mxu0
      %v1295 = vadd.f32 %v1185, %v1294
      %v1296 = vpop.f32.mrf.mxu0
      %v1297 = vadd.f32 %v1185, %v1296
      %1298 = vmatmul.bf16.gmra.mxu0 %v1221
      %v1299 = vpop.f32.mrf.mxu0
      %v1300 = vadd.f32 %v1185, %v1299
      %v1301 = vpop.f32.mrf.mxu0
      %v1302 = vadd.f32 %v1185, %v1301
      %1303 = vmatmul.bf16.gmra.mxu0 %v1224
      %v1304 = vpop.f32.mrf.mxu0
      %v1305 = vadd.f32 %v1185, %v1304
      %v1306 = vpop.f32.mrf.mxu0
      %v1307 = vadd.f32 %v1185, %v1306
      %1308 = vmatmul.bf16.gmra.mxu0 %v1227
      %v1309 = vpop.f32.mrf.mxu0
      %v1310 = vadd.f32 %v1185, %v1309
      %v1311 = vpop.f32.mrf.mxu0
      %v1312 = vadd.f32 %v1185, %v1311
      %1313 = vmatmul.bf16.gmra.mxu0 %v1230
      %v1314 = vpop.f32.mrf.mxu0
      %v1315 = vadd.f32 %v1185, %v1314
      %v1316 = vpop.f32.mrf.mxu0
      %v1317 = vadd.f32 %v1185, %v1316
      %1318 = vmatmul.bf16.gmra.mxu0 %v1233
      %v1319 = vpop.f32.mrf.mxu0
      %v1320 = vadd.f32 %v1185, %v1319
      %v1321 = vpop.f32.mrf.mxu0
      %v1322 = vadd.f32 %v1185, %v1321
      %1323 = vdwg.mxu0
      %v1324 = vmax.f32 %v1245, 0.0
      %v1325 = vmax.f32 %v1247, 0.0
      %v1326 = vmax.f32 %v1250, 0.0
      %v1327 = vmax.f32 %v1252, 0.0
      %v1328 = vmax.f32 %v1255, 0.0
      %v1329 = vmax.f32 %v1257, 0.0
      %v1330 = vmax.f32 %v1260, 0.0
      %v1331 = vmax.f32 %v1262, 0.0
      %v1332 = vmax.f32 %v1265, 0.0
      %v1333 = vmax.f32 %v1267, 0.0
      %v1334 = vmax.f32 %v1270, 0.0
      %v1335 = vmax.f32 %v1272, 0.0
      %v1336 = vmax.f32 %v1275, 0.0
      %v1337 = vmax.f32 %v1277, 0.0
      %v1338 = vmax.f32 %v1280, 0.0
      %v1339 = vmax.f32 %v1282, 0.0
      %v1340 = vmax.f32 %v1285, 0.0
      %v1341 = vmax.f32 %v1287, 0.0
      %v1342 = vmax.f32 %v1290, 0.0
      %v1343 = vmax.f32 %v1292, 0.0
      %v1344 = vmax.f32 %v1295, 0.0
      %v1345 = vmax.f32 %v1297, 0.0
      %v1346 = vmax.f32 %v1300, 0.0
      %v1347 = vmax.f32 %v1302, 0.0
      %v1348 = vmax.f32 %v1305, 0.0
      %v1349 = vmax.f32 %v1307, 0.0
      %v1350 = vmax.f32 %v1310, 0.0
      %v1351 = vmax.f32 %v1312, 0.0
      %v1352 = vmax.f32 %v1315, 0.0
      %v1353 = vmax.f32 %v1317, 0.0
      %v1354 = vmax.f32 %v1320, 0.0
      %v1355 = vmax.f32 %v1322, 0.0
      %v1356 = vld [vmem:[%s690] sm:$0xff]
      %v1357 = vld [vmem:[%s690 + $0x8] sm:$0xff]
      %v1358 = vld [vmem:[%s690 + $0x10] sm:$0xff]
      %v1359 = vld [vmem:[%s690 + $0x18] sm:$0xff]
      %v1360 = vpack.c.bf16 %v1325, %v1324
      %v1361 = vpack.c.bf16 %v1327, %v1326
      %v1362 = vpack.c.bf16 %v1329, %v1328
      %v1363 = vpack.c.bf16 %v1331, %v1330
      %v1364 = vpack.c.bf16 %v1333, %v1332
      %v1365 = vpack.c.bf16 %v1335, %v1334
      %v1366 = vpack.c.bf16 %v1337, %v1336
      %v1367 = vpack.c.bf16 %v1339, %v1338
      %v1368 = vpack.c.bf16 %v1341, %v1340
      %v1369 = vpack.c.bf16 %v1343, %v1342
      %v1370 = vpack.c.bf16 %v1345, %v1344
      %v1371 = vpack.c.bf16 %v1347, %v1346
      %v1372 = vpack.c.bf16 %v1349, %v1348
      %v1373 = vpack.c.bf16 %v1351, %v1350
      %v1374 = vpack.c.bf16 %v1353, %v1352
      %v1375 = vpack.c.bf16 %v1355, %v1354
      %v1376 = vpack.c.bf16 %v1357, %v1356
      %v1377 = vpack.c.bf16 %v1359, %v1358
      %v1378 = vld [vmem:[%s693] sm:$0x1]
      %v1380 = vperm.slane %v1378, 0
      %v1383 = vsel %vm774, %v1360, 0
      %v1386 = vsel %vm774, %v1361, 0
      %v1389 = vsel %vm774, %v1362, 0
      %v1392 = vsel %vm774, %v1363, 0
      %v1395 = vsel %vm774, %v1364, 0
      %v1398 = vsel %vm774, %v1365, 0
      %v1401 = vsel %vm774, %v1366, 0
      %v1404 = vsel %vm774, %v1367, 0
      %v1407 = vsel %vm774, %v1368, 0
      %v1410 = vsel %vm774, %v1369, 0
      %v1413 = vsel %vm774, %v1370, 0
      %v1416 = vsel %vm774, %v1371, 0
      %v1419 = vsel %vm774, %v1372, 0
      %v1422 = vsel %vm774, %v1373, 0
      %v1425 = vsel %vm774, %v1374, 0
      %v1428 = vsel %vm774, %v1375, 0
      %1430 = vmatpush.bf16.msra.mxu0 0
      %1431 = vmatpush.bf16.msra.mxu0 0
      %1432 = vmatpush.bf16.msra.mxu0 0
      %1433 = vmatpush.bf16.msra.mxu0 0
      %1434 = vmatpush.bf16.msra.mxu0 0
      %1435 = vmatpush.bf16.msra.mxu0 0
      %1436 = vmatpush.bf16.msra.mxu0 %v1377
      %1437 = vmatpush.bf16.msra.mxu0 %v1376
      %1438 = vmatmul.bf16.gmra.mxu0 %v1383
      %v1439 = vpop.f32.mrf.mxu0
      %v1440 = vadd.f32 %v1380, %v1439
      %v1441 = vpop.f32.mrf.mxu0
      %v1442 = vadd.f32 %v1380, %v1441
      %1443 = vmatmul.bf16.gmra.mxu0 %v1386
      %v1444 = vpop.f32.mrf.mxu0
      %v1445 = vadd.f32 %v1380, %v1444
      %v1446 = vpop.f32.mrf.mxu0
      %v1447 = vadd.f32 %v1380, %v1446
      %1448 = vmatmul.bf16.gmra.mxu0 %v1389
      %v1449 = vpop.f32.mrf.mxu0
      %v1450 = vadd.f32 %v1380, %v1449
      %v1451 = vpop.f32.mrf.mxu0
      %v1452 = vadd.f32 %v1380, %v1451
      %1453 = vmatmul.bf16.gmra.mxu0 %v1392
      %v1454 = vpop.f32.mrf.mxu0
      %v1455 = vadd.f32 %v1380, %v1454
      %v1456 = vpop.f32.mrf.mxu0
      %v1457 = vadd.f32 %v1380, %v1456
      %1458 = vmatmul.bf16.gmra.mxu0 %v1395
      %v1459 = vpop.f32.mrf.mxu0
      %v1460 = vadd.f32 %v1380, %v1459
      %v1461 = vpop.f32.mrf.mxu0
      %v1462 = vadd.f32 %v1380, %v1461
      %1463 = vmatmul.bf16.gmra.mxu0 %v1398
      %v1464 = vpop.f32.mrf.mxu0
      %v1465 = vadd.f32 %v1380, %v1464
      %v1466 = vpop.f32.mrf.mxu0
      %v1467 = vadd.f32 %v1380, %v1466
      %1468 = vmatmul.bf16.gmra.mxu0 %v1401
      %v1469 = vpop.f32.mrf.mxu0
      %v1470 = vadd.f32 %v1380, %v1469
      %v1471 = vpop.f32.mrf.mxu0
      %v1472 = vadd.f32 %v1380, %v1471
      %1473 = vmatmul.bf16.gmra.mxu0 %v1404
      %v1474 = vpop.f32.mrf.mxu0
      %v1475 = vadd.f32 %v1380, %v1474
      %v1476 = vpop.f32.mrf.mxu0
      %v1477 = vadd.f32 %v1380, %v1476
      %1478 = vmatmul.bf16.gmra.mxu0 %v1407
      %v1479 = vpop.f32.mrf.mxu0
      %v1480 = vadd.f32 %v1380, %v1479
      %v1481 = vpop.f32.mrf.mxu0
      %v1482 = vadd.f32 %v1380, %v1481
      %1483 = vmatmul.bf16.gmra.mxu0 %v1410
      %v1484 = vpop.f32.mrf.mxu0
      %v1485 = vadd.f32 %v1380, %v1484
      %v1486 = vpop.f32.mrf.mxu0
      %v1487 = vadd.f32 %v1380, %v1486
      %1488 = vmatmul.bf16.gmra.mxu0 %v1413
      %v1489 = vpop.f32.mrf.mxu0
      %v1490 = vadd.f32 %v1380, %v1489
      %v1491 = vpop.f32.mrf.mxu0
      %v1492 = vadd.f32 %v1380, %v1491
      %1493 = vmatmul.bf16.gmra.mxu0 %v1416
      %v1494 = vpop.f32.mrf.mxu0
      %v1495 = vadd.f32 %v1380, %v1494
      %v1496 = vpop.f32.mrf.mxu0
      %v1497 = vadd.f32 %v1380, %v1496
      %1498 = vmatmul.bf16.gmra.mxu0 %v1419
      %v1499 = vpop.f32.mrf.mxu0
      %v1500 = vadd.f32 %v1380, %v1499
      %v1501 = vpop.f32.mrf.mxu0
      %v1502 = vadd.f32 %v1380, %v1501
      %1503 = vmatmul.bf16.gmra.mxu0 %v1422
      %v1504 = vpop.f32.mrf.mxu0
      %v1505 = vadd.f32 %v1380, %v1504
      %v1506 = vpop.f32.mrf.mxu0
      %v1507 = vadd.f32 %v1380, %v1506
      %1508 = vmatmul.bf16.gmra.mxu0 %v1425
      %v1509 = vpop.f32.mrf.mxu0
      %v1510 = vadd.f32 %v1380, %v1509
      %v1511 = vpop.f32.mrf.mxu0
      %v1512 = vadd.f32 %v1380, %v1511
      %1513 = vmatmul.bf16.gmra.mxu0 %v1428
      %v1514 = vpop.f32.mrf.mxu0
      %v1515 = vadd.f32 %v1380, %v1514
      %v1516 = vpop.f32.mrf.mxu0
      %v1517 = vadd.f32 %v1380, %v1516
      %1518 = vdwg.mxu0
      %v1519 = vmax.f32 %v1440, 0.0
      %v1520 = vmax.f32 %v1442, 0.0
      %v1521 = vmax.f32 %v1445, 0.0
      %v1522 = vmax.f32 %v1447, 0.0
      %v1523 = vmax.f32 %v1450, 0.0
      %v1524 = vmax.f32 %v1452, 0.0
      %v1525 = vmax.f32 %v1455, 0.0
      %v1526 = vmax.f32 %v1457, 0.0
      %v1527 = vmax.f32 %v1460, 0.0
      %v1528 = vmax.f32 %v1462, 0.0
      %v1529 = vmax.f32 %v1465, 0.0
      %v1530 = vmax.f32 %v1467, 0.0
      %v1531 = vmax.f32 %v1470, 0.0
      %v1532 = vmax.f32 %v1472, 0.0
      %v1533 = vmax.f32 %v1475, 0.0
      %v1534 = vmax.f32 %v1477, 0.0
      %v1535 = vmax.f32 %v1480, 0.0
      %v1536 = vmax.f32 %v1482, 0.0
      %v1537 = vmax.f32 %v1485, 0.0
      %v1538 = vmax.f32 %v1487, 0.0
      %v1539 = vmax.f32 %v1490, 0.0
      %v1540 = vmax.f32 %v1492, 0.0
      %v1541 = vmax.f32 %v1495, 0.0
      %v1542 = vmax.f32 %v1497, 0.0
      %v1543 = vmax.f32 %v1500, 0.0
      %v1544 = vmax.f32 %v1502, 0.0
      %v1545 = vmax.f32 %v1505, 0.0
      %v1546 = vmax.f32 %v1507, 0.0
      %v1547 = vmax.f32 %v1510, 0.0
      %v1548 = vmax.f32 %v1512, 0.0
      %v1549 = vmax.f32 %v1515, 0.0
      %v1550 = vmax.f32 %v1517, 0.0
      %v1551 = vld [vmem:[%s698] sm:$0xff]
      %v1552 = vld [vmem:[%s698 + $0x8] sm:$0xff]
      %v1553 = vld [vmem:[%s698 + $0x10] sm:$0xff]
      %v1554 = vld [vmem:[%s698 + $0x18] sm:$0xff]
      %v1555 = vpack.c.bf16 %v1520, %v1519
      %v1556 = vpack.c.bf16 %v1522, %v1521
      %v1557 = vpack.c.bf16 %v1524, %v1523
      %v1558 = vpack.c.bf16 %v1526, %v1525
      %v1559 = vpack.c.bf16 %v1528, %v1527
      %v1560 = vpack.c.bf16 %v1530, %v1529
      %v1561 = vpack.c.bf16 %v1532, %v1531
      %v1562 = vpack.c.bf16 %v1534, %v1533
      %v1563 = vpack.c.bf16 %v1536, %v1535
      %v1564 = vpack.c.bf16 %v1538, %v1537
      %v1565 = vpack.c.bf16 %v1540, %v1539
      %v1566 = vpack.c.bf16 %v1542, %v1541
      %v1567 = vpack.c.bf16 %v1544, %v1543
      %v1568 = vpack.c.bf16 %v1546, %v1545
      %v1569 = vpack.c.bf16 %v1548, %v1547
      %v1570 = vpack.c.bf16 %v1550, %v1549
      %v1571 = vpack.c.bf16 %v1552, %v1551
      %v1572 = vpack.c.bf16 %v1554, %v1553
      %v1574 = vsel %vm774, %v1555, 0
      %v1577 = vsel %vm774, %v1556, 0
      %v1580 = vsel %vm774, %v1557, 0
      %v1583 = vsel %vm774, %v1558, 0
      %v1586 = vsel %vm774, %v1559, 0
      %v1589 = vsel %vm774, %v1560, 0
      %v1592 = vsel %vm774, %v1561, 0
      %v1595 = vsel %vm774, %v1562, 0
      %v1598 = vsel %vm774, %v1563, 0
      %v1601 = vsel %vm774, %v1564, 0
      %v1604 = vsel %vm774, %v1565, 0
      %v1607 = vsel %vm774, %v1566, 0
      %v1610 = vsel %vm774, %v1567, 0
      %v1613 = vsel %vm774, %v1568, 0
      %v1616 = vsel %vm774, %v1569, 0
      %v1619 = vsel %vm774, %v1570, 0
      %1621 = vmatpush.bf16.msra.mxu0 0
      %1622 = vmatpush.bf16.msra.mxu0 0
      %1623 = vmatpush.bf16.msra.mxu0 0
      %1624 = vmatpush.bf16.msra.mxu0 0
      %1625 = vmatpush.bf16.msra.mxu0 0
      %1626 = vmatpush.bf16.msra.mxu0 0
      %1627 = vmatpush.bf16.msra.mxu0 %v1572
      %1628 = vmatpush.bf16.msra.mxu0 %v1571
      %1629 = vmatmul.bf16.gmra.mxu0 %v1574
      %v1630 = vpop.f32.mrf.mxu0
      %v1631 = vadd.f32 0.0, %v1630
      %v1632 = vpop.f32.mrf.mxu0
      %v1633 = vadd.f32 0.0, %v1632
      %1634 = vmatmul.bf16.gmra.mxu0 %v1577
      %v1635 = vpop.f32.mrf.mxu0
      %v1636 = vadd.f32 0.0, %v1635
      %v1637 = vpop.f32.mrf.mxu0
      %v1638 = vadd.f32 0.0, %v1637
      %1639 = vmatmul.bf16.gmra.mxu0 %v1580
      %v1640 = vpop.f32.mrf.mxu0
      %v1641 = vadd.f32 0.0, %v1640
      %v1642 = vpop.f32.mrf.mxu0
      %v1643 = vadd.f32 0.0, %v1642
      %1644 = vmatmul.bf16.gmra.mxu0 %v1583
      %v1645 = vpop.f32.mrf.mxu0
      %v1646 = vadd.f32 0.0, %v1645
      %v1647 = vpop.f32.mrf.mxu0
      %v1648 = vadd.f32 0.0, %v1647
      %1649 = vmatmul.bf16.gmra.mxu0 %v1586
      %v1650 = vpop.f32.mrf.mxu0
      %v1651 = vadd.f32 0.0, %v1650
      %v1652 = vpop.f32.mrf.mxu0
      %v1653 = vadd.f32 0.0, %v1652
      %1654 = vmatmul.bf16.gmra.mxu0 %v1589
      %v1655 = vpop.f32.mrf.mxu0
      %v1656 = vadd.f32 0.0, %v1655
      %v1657 = vpop.f32.mrf.mxu0
      %v1658 = vadd.f32 0.0, %v1657
      %1659 = vmatmul.bf16.gmra.mxu0 %v1592
      %v1660 = vpop.f32.mrf.mxu0
      %v1661 = vadd.f32 0.0, %v1660
      %v1662 = vpop.f32.mrf.mxu0
      %v1663 = vadd.f32 0.0, %v1662
      %1664 = vmatmul.bf16.gmra.mxu0 %v1595
      %v1665 = vpop.f32.mrf.mxu0
      %v1666 = vadd.f32 0.0, %v1665
      %v1667 = vpop.f32.mrf.mxu0
      %v1668 = vadd.f32 0.0, %v1667
      %1669 = vmatmul.bf16.gmra.mxu0 %v1598
      %v1670 = vpop.f32.mrf.mxu0
      %v1671 = vadd.f32 0.0, %v1670
      %v1672 = vpop.f32.mrf.mxu0
      %v1673 = vadd.f32 0.0, %v1672
      %1674 = vmatmul.bf16.gmra.mxu0 %v1601
      %v1675 = vpop.f32.mrf.mxu0
      %v1676 = vadd.f32 0.0, %v1675
      %v1677 = vpop.f32.mrf.mxu0
      %v1678 = vadd.f32 0.0, %v1677
      %1679 = vmatmul.bf16.gmra.mxu0 %v1604
      %v1680 = vpop.f32.mrf.mxu0
      %v1681 = vadd.f32 0.0, %v1680
      %v1682 = vpop.f32.mrf.mxu0
      %v1683 = vadd.f32 0.0, %v1682
      %1684 = vmatmul.bf16.gmra.mxu0 %v1607
      %v1685 = vpop.f32.mrf.mxu0
      %v1686 = vadd.f32 0.0, %v1685
      %v1687 = vpop.f32.mrf.mxu0
      %v1688 = vadd.f32 0.0, %v1687
      %1689 = vmatmul.bf16.gmra.mxu0 %v1610
      %v1690 = vpop.f32.mrf.mxu0
      %v1691 = vadd.f32 0.0, %v1690
      %v1692 = vpop.f32.mrf.mxu0
      %v1693 = vadd.f32 0.0, %v1692
      %1694 = vmatmul.bf16.gmra.mxu0 %v1613
      %v1695 = vpop.f32.mrf.mxu0
      %v1696 = vadd.f32 0.0, %v1695
      %v1697 = vpop.f32.mrf.mxu0
      %v1698 = vadd.f32 0.0, %v1697
      %1699 = vmatmul.bf16.gmra.mxu0 %v1616
      %v1700 = vpop.f32.mrf.mxu0
      %v1701 = vadd.f32 0.0, %v1700
      %v1702 = vpop.f32.mrf.mxu0
      %v1703 = vadd.f32 0.0, %v1702
      %1704 = vmatmul.bf16.gmra.mxu0 %v1619
      %v1705 = vpop.f32.mrf.mxu0
      %v1706 = vadd.f32 0.0, %v1705
      %v1707 = vpop.f32.mrf.mxu0
      %v1708 = vadd.f32 0.0, %v1707
      %1709 = vdwg.mxu0
      %v1710 = vld [vmem:[#allocation4] sm:$0xff]
      %v1711 = vld [vmem:[#allocation4 + $0x8] sm:$0xff]
      %1713 = vset.pattern.permute.xlu0 0
      %1714 = vperm.xlu0 %1713, %v1631
      %v1715 = vpop.permute.xlu0 %1714
      %1718 = vset.pattern.permute.xlu0 0
      %1719 = vperm.xlu0 %1718, %v1633
      %v1720 = vpop.permute.xlu0 %1719
      %1723 = vset.pattern.permute.xlu0 0
      %1724 = vperm.xlu0 %1723, %v1636
      %v1725 = vpop.permute.xlu0 %1724
      %1728 = vset.pattern.permute.xlu0 0
      %1729 = vperm.xlu0 %1728, %v1638
      %v1730 = vpop.permute.xlu0 %1729
      %1733 = vset.pattern.permute.xlu0 0
      %1734 = vperm.xlu0 %1733, %v1641
      %v1735 = vpop.permute.xlu0 %1734
      %1738 = vset.pattern.permute.xlu0 0
      %1739 = vperm.xlu0 %1738, %v1643
      %v1740 = vpop.permute.xlu0 %1739
      %1743 = vset.pattern.permute.xlu0 0
      %1744 = vperm.xlu0 %1743, %v1646
      %v1745 = vpop.permute.xlu0 %1744
      %1748 = vset.pattern.permute.xlu0 0
      %1749 = vperm.xlu0 %1748, %v1648
      %v1750 = vpop.permute.xlu0 %1749
      %1753 = vset.pattern.permute.xlu0 0
      %1754 = vperm.xlu0 %1753, %v1651
      %v1755 = vpop.permute.xlu0 %1754
      %1758 = vset.pattern.permute.xlu0 0
      %1759 = vperm.xlu0 %1758, %v1653
      %v1760 = vpop.permute.xlu0 %1759
      %1763 = vset.pattern.permute.xlu0 0
      %1764 = vperm.xlu0 %1763, %v1656
      %v1765 = vpop.permute.xlu0 %1764
      %1768 = vset.pattern.permute.xlu0 0
      %1769 = vperm.xlu0 %1768, %v1658
      %v1770 = vpop.permute.xlu0 %1769
      %1773 = vset.pattern.permute.xlu0 0
      %1774 = vperm.xlu0 %1773, %v1661
      %v1775 = vpop.permute.xlu0 %1774
      %1778 = vset.pattern.permute.xlu0 0
      %1779 = vperm.xlu0 %1778, %v1663
      %v1780 = vpop.permute.xlu0 %1779
      %1783 = vset.pattern.permute.xlu0 0
      %1784 = vperm.xlu0 %1783, %v1666
      %v1785 = vpop.permute.xlu0 %1784
      %1788 = vset.pattern.permute.xlu0 0
      %1789 = vperm.xlu0 %1788, %v1668
      %v1790 = vpop.permute.xlu0 %1789
      %1793 = vset.pattern.permute.xlu0 0
      %1794 = vperm.xlu0 %1793, %v1671
      %v1795 = vpop.permute.xlu0 %1794
      %1798 = vset.pattern.permute.xlu0 0
      %1799 = vperm.xlu0 %1798, %v1673
      %v1800 = vpop.permute.xlu0 %1799
      %1803 = vset.pattern.permute.xlu0 0
      %1804 = vperm.xlu0 %1803, %v1676
      %v1805 = vpop.permute.xlu0 %1804
      %1808 = vset.pattern.permute.xlu0 0
      %1809 = vperm.xlu0 %1808, %v1678
      %v1810 = vpop.permute.xlu0 %1809
      %1813 = vset.pattern.permute.xlu0 0
      %1814 = vperm.xlu0 %1813, %v1681
      %v1815 = vpop.permute.xlu0 %1814
      %1818 = vset.pattern.permute.xlu0 0
      %1819 = vperm.xlu0 %1818, %v1683
      %v1820 = vpop.permute.xlu0 %1819
      %1823 = vset.pattern.permute.xlu0 0
      %1824 = vperm.xlu0 %1823, %v1686
      %v1825 = vpop.permute.xlu0 %1824
      %1828 = vset.pattern.permute.xlu0 0
      %1829 = vperm.xlu0 %1828, %v1688
      %v1830 = vpop.permute.xlu0 %1829
      %1833 = vset.pattern.permute.xlu0 0
      %1834 = vperm.xlu0 %1833, %v1691
      %v1835 = vpop.permute.xlu0 %1834
      %1838 = vset.pattern.permute.xlu0 0
      %1839 = vperm.xlu0 %1838, %v1693
      %v1840 = vpop.permute.xlu0 %1839
      %1843 = vset.pattern.permute.xlu0 0
      %1844 = vperm.xlu0 %1843, %v1696
      %v1845 = vpop.permute.xlu0 %1844
      %1848 = vset.pattern.permute.xlu0 0
      %1849 = vperm.xlu0 %1848, %v1698
      %v1850 = vpop.permute.xlu0 %1849
      %1853 = vset.pattern.permute.xlu0 0
      %1854 = vperm.xlu0 %1853, %v1701
      %v1855 = vpop.permute.xlu0 %1854
      %1858 = vset.pattern.permute.xlu0 0
      %1859 = vperm.xlu0 %1858, %v1703
      %v1860 = vpop.permute.xlu0 %1859
      %1863 = vset.pattern.permute.xlu0 0
      %1864 = vperm.xlu0 %1863, %v1706
      %v1865 = vpop.permute.xlu0 %1864
      %1868 = vset.pattern.permute.xlu0 0
      %1869 = vperm.xlu0 %1868, %v1708
      %v1870 = vpop.permute.xlu0 %1869
      %v1872 = vmul.f32 %v1715, %v824
      %v1873 = vmul.f32 %v1720, %v825
      %v1874 = vmul.f32 %v1725, %v826
      %v1875 = vmul.f32 %v1730, %v827
      %v1876 = vmul.f32 %v1735, %v828
      %v1877 = vmul.f32 %v1740, %v829
      %v1878 = vmul.f32 %v1745, %v830
      %v1879 = vmul.f32 %v1750, %v831
      %v1880 = vmul.f32 %v1755, %v832
      %v1881 = vmul.f32 %v1760, %v833
      %v1882 = vmul.f32 %v1765, %v834
      %v1883 = vmul.f32 %v1770, %v835
      %v1884 = vmul.f32 %v1775, %v836
      %v1885 = vmul.f32 %v1780, %v837
      %v1886 = vmul.f32 %v1785, %v838
      %v1887 = vmul.f32 %v1790, %v839
      %v1888 = vmul.f32 %v1795, %v840
      %v1889 = vmul.f32 %v1800, %v841
      %v1890 = vmul.f32 %v1805, %v842
      %v1891 = vmul.f32 %v1810, %v843
      %v1892 = vmul.f32 %v1815, %v844
      %v1893 = vmul.f32 %v1820, %v845
      %v1894 = vmul.f32 %v1825, %v846
      %v1895 = vmul.f32 %v1830, %v847
      %v1896 = vmul.f32 %v1835, %v848
      %v1897 = vmul.f32 %v1840, %v849
      %v1898 = vmul.f32 %v1845, %v850
      %v1899 = vmul.f32 %v1850, %v851
      %v1900 = vmul.f32 %v1855, %v852
      %v1901 = vmul.f32 %v1860, %v853
      %v1902 = vmul.f32 %v1865, %v854
      %v1903 = vmul.f32 %v1870, %v855
      %1936 = vrot.lane.b32.xlu0 %v1872, 32
      %v1937 = vpop.permute.xlu0 %1936
      %1938 = vrot.lane.b32.xlu0 %v1873, 32
      %v1939 = vpop.permute.xlu0 %1938
      %1940 = vrot.lane.b32.xlu0 %v1874, 32
      %v1941 = vpop.permute.xlu0 %1940
      %1942 = vrot.lane.b32.xlu0 %v1875, 32
      %v1943 = vpop.permute.xlu0 %1942
      %1944 = vrot.lane.b32.xlu0 %v1876, 32
      %v1945 = vpop.permute.xlu0 %1944
      %1946 = vrot.lane.b32.xlu0 %v1877, 32
      %v1947 = vpop.permute.xlu0 %1946
      %1948 = vrot.lane.b32.xlu0 %v1878, 32
      %v1949 = vpop.permute.xlu0 %1948
      %1950 = vrot.lane.b32.xlu0 %v1879, 32
      %v1951 = vpop.permute.xlu0 %1950
      %1952 = vrot.lane.b32.xlu0 %v1880, 32
      %v1953 = vpop.permute.xlu0 %1952
      %1954 = vrot.lane.b32.xlu0 %v1881, 32
      %v1955 = vpop.permute.xlu0 %1954
      %1956 = vrot.lane.b32.xlu0 %v1882, 32
      %v1957 = vpop.permute.xlu0 %1956
      %1958 = vrot.lane.b32.xlu0 %v1883, 32
      %v1959 = vpop.permute.xlu0 %1958
      %1960 = vrot.lane.b32.xlu0 %v1884, 32
      %v1961 = vpop.permute.xlu0 %1960
      %1962 = vrot.lane.b32.xlu0 %v1885, 32
      %v1963 = vpop.permute.xlu0 %1962
      %1964 = vrot.lane.b32.xlu0 %v1886, 32
      %v1965 = vpop.permute.xlu0 %1964
      %1966 = vrot.lane.b32.xlu0 %v1887, 32
      %v1967 = vpop.permute.xlu0 %1966
      %1968 = vrot.lane.b32.xlu0 %v1888, 32
      %v1969 = vpop.permute.xlu0 %1968
      %1970 = vrot.lane.b32.xlu0 %v1889, 32
      %v1971 = vpop.permute.xlu0 %1970
      %1972 = vrot.lane.b32.xlu0 %v1890, 32
      %v1973 = vpop.permute.xlu0 %1972
      %1974 = vrot.lane.b32.xlu0 %v1891, 32
      %v1975 = vpop.permute.xlu0 %1974
      %1976 = vrot.lane.b32.xlu0 %v1892, 32
      %v1977 = vpop.permute.xlu0 %1976
      %1978 = vrot.lane.b32.xlu0 %v1893, 32
      %v1979 = vpop.permute.xlu0 %1978
      %1980 = vrot.lane.b32.xlu0 %v1894, 32
      %v1981 = vpop.permute.xlu0 %1980
      %1982 = vrot.lane.b32.xlu0 %v1895, 32
      %v1983 = vpop.permute.xlu0 %1982
      %1984 = vrot.lane.b32.xlu0 %v1896, 32
      %v1985 = vpop.permute.xlu0 %1984
      %1986 = vrot.lane.b32.xlu0 %v1897, 32
      %v1987 = vpop.permute.xlu0 %1986
      %1988 = vrot.lane.b32.xlu0 %v1898, 32
      %v1989 = vpop.permute.xlu0 %1988
      %1990 = vrot.lane.b32.xlu0 %v1899, 32
      %v1991 = vpop.permute.xlu0 %1990
      %1992 = vrot.lane.b32.xlu0 %v1900, 32
      %v1993 = vpop.permute.xlu0 %1992
      %1994 = vrot.lane.b32.xlu0 %v1901, 32
      %v1995 = vpop.permute.xlu0 %1994
      %1996 = vrot.lane.b32.xlu0 %v1902, 32
      %v1997 = vpop.permute.xlu0 %1996
      %1998 = vrot.lane.b32.xlu0 %v1903, 32
      %v1999 = vpop.permute.xlu0 %1998
      %v2032 = vsel %vm774, %v1324, %v1937
      %v2033 = vsel %vm774, %v1325, %v1939
      %v2034 = vsel %vm774, %v1326, %v1941
      %v2035 = vsel %vm774, %v1327, %v1943
      %v2036 = vsel %vm774, %v1328, %v1945
      %v2037 = vsel %vm774, %v1329, %v1947
      %v2038 = vsel %vm774, %v1330, %v1949
      %v2039 = vsel %vm774, %v1331, %v1951
      %v2040 = vsel %vm774, %v1332, %v1953
      %v2041 = vsel %vm774, %v1333, %v1955
      %v2042 = vsel %vm774, %v1334, %v1957
      %v2043 = vsel %vm774, %v1335, %v1959
      %v2044 = vsel %vm774, %v1336, %v1961
      %v2045 = vsel %vm774, %v1337, %v1963
      %v2046 = vsel %vm774, %v1338, %v1965
      %v2047 = vsel %vm774, %v1339, %v1967
      %v2048 = vsel %vm774, %v1340, %v1969
      %v2049 = vsel %vm774, %v1341, %v1971
      %v2050 = vsel %vm774, %v1342, %v1973
      %v2051 = vsel %vm774, %v1343, %v1975
      %v2052 = vsel %vm774, %v1344, %v1977
      %v2053 = vsel %vm774, %v1345, %v1979
      %v2054 = vsel %vm774, %v1346, %v1981
      %v2055 = vsel %vm774, %v1347, %v1983
      %v2056 = vsel %vm774, %v1348, %v1985
      %v2057 = vsel %vm774, %v1349, %v1987
      %v2058 = vsel %vm774, %v1350, %v1989
      %v2059 = vsel %vm774, %v1351, %v1991
      %v2060 = vsel %vm774, %v1352, %v1993
      %v2061 = vsel %vm774, %v1353, %v1995
      %v2062 = vsel %vm774, %v1354, %v1997
      %v2063 = vsel %vm774, %v1355, %v1999
      %v2064 = vpack.c.bf16 %v2033, %v2032
      %v2065 = vpack.c.bf16 %v2035, %v2034
      %v2066 = vpack.c.bf16 %v2037, %v2036
      %v2067 = vpack.c.bf16 %v2039, %v2038
      %v2068 = vpack.c.bf16 %v2041, %v2040
      %v2069 = vpack.c.bf16 %v2043, %v2042
      %v2070 = vpack.c.bf16 %v2045, %v2044
      %v2071 = vpack.c.bf16 %v2047, %v2046
      %v2072 = vpack.c.bf16 %v2049, %v2048
      %v2073 = vpack.c.bf16 %v2051, %v2050
      %v2074 = vpack.c.bf16 %v2053, %v2052
      %v2075 = vpack.c.bf16 %v2055, %v2054
      %v2076 = vpack.c.bf16 %v2057, %v2056
      %v2077 = vpack.c.bf16 %v2059, %v2058
      %v2078 = vpack.c.bf16 %v2061, %v2060
      %v2079 = vpack.c.bf16 %v2063, %v2062
      %v2082 = vunpack.c.l.b16 %v1710
      %v2083 = vunpack.c.h.b16 %v1710
      %v2084 = vunpack.c.l.b16 %v1711
      %v2085 = vunpack.c.h.b16 %v1711
      %v2086 = vpack.c.b16 %v2084, %v2082
      %v2087 = vpack.c.b16 %v2085, %v2083
      %2090 = vmatpush.bf16.msra.mxu0 %v2071
      %2091 = vmatpush.bf16.msra.mxu0 %v2070
      %2092 = vmatpush.bf16.msra.mxu0 %v2069
      %2093 = vmatpush.bf16.msra.mxu0 %v2068
      %2094 = vmatpush.bf16.msra.mxu0 %v2067
      %2095 = vmatpush.bf16.msra.mxu0 %v2066
      %2096 = vmatpush.bf16.msra.mxu0 %v2065
      %2097 = vmatpush.bf16.msra.mxu0 %v2064
      %2098 = vmatmul.bf16.gmra.mxu0 %v2086
      %v2099 = vpop.f32.mrf.mxu0
      %v2100 = vadd.f32 0.0, %v2099
      %v2101 = vpop.f32.mrf.mxu0
      %v2102 = vadd.f32 0.0, %v2101
      %2103 = vdwg.mxu0
      %2104 = vmatpush.bf16.msra.mxu0 %v2079
      %2105 = vmatpush.bf16.msra.mxu0 %v2078
      %2106 = vmatpush.bf16.msra.mxu0 %v2077
      %2107 = vmatpush.bf16.msra.mxu0 %v2076
      %2108 = vmatpush.bf16.msra.mxu0 %v2075
      %2109 = vmatpush.bf16.msra.mxu0 %v2074
      %2110 = vmatpush.bf16.msra.mxu0 %v2073
      %2111 = vmatpush.bf16.msra.mxu0 %v2072
      %2112 = vmatmul.bf16.gmra.mxu0 %v2087
      %v2113 = vpop.f32.mrf.mxu0
      %v2114 = vadd.f32 %v2100, %v2113
      %v2115 = vpop.f32.mrf.mxu0
      %v2116 = vadd.f32 %v2102, %v2115
      %2117 = vdwg.mxu0
      %v2118 = vmul.f32 %v2114, 0.06666667
      %v2119 = vmul.f32 %v2116, 0.06666667
      %2122 = vrot.lane.b32.xlu0 %v2118, 96
      %v2123 = vpop.permute.xlu0 %2122
      %2124 = vrot.lane.b32.xlu0 %v2119, 96
      %v2125 = vpop.permute.xlu0 %2124
      %v2128 = vadd.f32 %v765, %v2123
      %v2129 = vadd.f32 %v766, %v2125
      %2132 = vrot.lane.b32.xlu0 %v2114, 32
      %v2133 = vpop.permute.xlu0 %2132
      %2134 = vrot.lane.b32.xlu0 %v2116, 32
      %v2135 = vpop.permute.xlu0 %2134
      %v2138 = vsel %vm774, %v763, %v2133
      %v2139 = vsel %vm774, %v764, %v2135
      %v2140 = vld [vmem:[%s674] sm:$0xff]
      %v2141 = vld [vmem:[%s674 + $0x8] sm:$0xff]
      %v2142 = vld [vmem:[%s674 + $0x10] sm:$0xff]
      %v2143 = vld [vmem:[%s674 + $0x18] sm:$0xff]
      %v2144 = vld [vmem:[%s674 + $0x20] sm:$0xff]
      %v2145 = vld [vmem:[%s674 + $0x28] sm:$0xff]
      %v2146 = vld [vmem:[%s674 + $0x30] sm:$0xff]
      %v2147 = vld [vmem:[%s674 + $0x38] sm:$0xff]
      %v2148 = vpack.c.bf16 %v2139, %v2138
      %v2149 = vpack.c.bf16 %v2141, %v2140
      %v2150 = vpack.c.bf16 %v2143, %v2142
      %v2151 = vpack.c.bf16 %v2145, %v2144
      %v2152 = vpack.c.bf16 %v2147, %v2146
      %v2153 = vld [vmem:[%s677] sm:$0x1]
      %v2155 = vperm.slane %v2153, 0
      %vm2157 = vcmask 523264
      %v2159 = vsel %vm2157, %v2148, 0
      %2161 = vmatpush.bf16.msra.mxu0 0
      %2162 = vmatpush.bf16.msra.mxu0 0
      %2163 = vmatpush.bf16.msra.mxu0 0
      %2164 = vmatpush.bf16.msra.mxu0 0
      %2165 = vmatpush.bf16.msra.mxu0 %v2152
      %2166 = vmatpush.bf16.msra.mxu0 %v2151
      %2167 = vmatpush.bf16.msra.mxu0 %v2150
      %2168 = vmatpush.bf16.msra.mxu0 %v2149
      %2169 = vmatmul.bf16.gmra.mxu0 %v2159
      %v2170 = vpop.f32.mrf.mxu0
      %v2171 = vadd.f32 %v2155, %v2170
      %v2172 = vpop.f32.mrf.mxu0
      %v2173 = vadd.f32 %v2155, %v2172
      %2174 = vdwg.mxu0
      %v2175 = vmax.f32 %v2171, 0.0
      %v2176 = vmax.f32 %v2173, 0.0
      %v2177 = vld [vmem:[%s682] sm:$0xff]
      %v2178 = vld [vmem:[%s682 + $0x8] sm:$0xff]
      %v2179 = vld [vmem:[%s682 + $0x10] sm:$0xff]
      %v2180 = vld [vmem:[%s682 + $0x18] sm:$0xff]
      %v2181 = vpack.c.bf16 %v2176, %v2175
      %v2182 = vpack.c.bf16 %v2178, %v2177
      %v2183 = vpack.c.bf16 %v2180, %v2179
      %v2185 = vsel %vm774, %v2181, 0
      %2187 = vmatpush.bf16.msra.mxu0 0
      %2188 = vmatpush.bf16.msra.mxu0 0
      %2189 = vmatpush.bf16.msra.mxu0 0
      %2190 = vmatpush.bf16.msra.mxu0 0
      %2191 = vmatpush.bf16.msra.mxu0 0
      %2192 = vmatpush.bf16.msra.mxu0 0
      %2193 = vmatpush.bf16.msra.mxu0 %v2183
      %2194 = vmatpush.bf16.msra.mxu0 %v2182
      %2195 = vmatmul.bf16.gmra.mxu0 %v2185
      %v2196 = vpop.f32.mrf.mxu0
      %v2197 = vadd.f32 0.0, %v2196
      %v2198 = vpop.f32.mrf.mxu0
      %v2199 = vadd.f32 0.0, %v2198
      %2200 = vdwg.mxu0
      %v2201 = vadd.f32 %v763, %v2197
      %v2202 = vadd.f32 %v764, %v2199
      %v2203 = vld [vmem:[%s685] sm:$0x1]
      %v2205 = vperm.slane %v2203, 0
      %v2207 = vadd.f32 %v2201, %v2205
      %v2208 = vadd.f32 %v2202, %v2205
      %2209 = vst.msk [vmem:[#allocation2] sm:$0xff] %vm774, %v2207
      %2210 = vst.msk [vmem:[#allocation2 + $0x8] sm:$0xff] %vm774, %v2208
      %2211 = vst.msk [vmem:[#allocation3] sm:$0xff] %vm888, %v2128
      %2212 = vst.msk [vmem:[#allocation3 + $0x8] sm:$0xff] %vm888, %v2129
      %p2213 = scmp.eq.s32.totalorder %s30, 2
      // Predicated region
      $region81: #{egnn_forward.1} parent=75 // pred_check
        %p2214 = pneg %p2213
      $region82: #{egnn_forward.1} parent=75 // pred_check_branch
        %2216 = sbr.rel (%p2214) target = $region84
      $region83: #{egnn_forward.1} parent=75 // pred_region
        %v2217 = vsel %vm774, %v2207, 0.0
        %v2218 = vsel %vm774, %v2208, 0.0
        %v2219 = vadd.f32 %v2217, %v2218
        %v2220 = vrot.slane %v2219, 4
        %v2221 = vadd.f32 %v2219, %v2220
        %v2222 = vrot.slane %v2221, 2
        %v2223 = vadd.f32 %v2221, %v2222
        %v2224 = vrot.slane %v2223, 1
        %v2225 = vadd.f32 %v2223, %v2224
        %2228 = vrot.lane.b32.xlu0 %v2128, 32
        %v2229 = vpop.permute.xlu0 %2228
        %2230 = vrot.lane.b32.xlu0 %v2129, 32
        %v2231 = vpop.permute.xlu0 %2230
        %2235 = vrot.lane.b32.xlu0 %v2225, 64
        %v2236 = vpop.permute.xlu0 %2235
        %v2238 = vsel %vm774, %v2207, %v2229
        %v2239 = vsel %vm774, %v2208, %v2231
        %vm2240 = vcmask 285696
        %v2241 = vsel %vm2240, %v2238, 0.0
        %v2242 = vsel %vm2240, %v2239, 0.0
        %v2243 = vsel %vm2157, %v2241, %v2236
        %v2244 = vsel %vm2157, %v2242, %v2236
        %vm2245 = vcmask 785408
        %v2246 = vsel %vm2245, %v2243, 0.0
        %v2247 = vsel %vm2245, %v2244, 0.0
        %2248 = vst [vmem:[%s703] sm:$0xff] %v2246
        %2249 = vst [vmem:[%s703 + $0x8] sm:$0xff] %v2247
      $region84: #{egnn_forward.1} parent=75 // pred_fallthru
        _
      %p2250 = scmp.lt.s32.totalorder %s29, 1
      %s2251 = scalar_select %p2250, %s29, 1
      %s2252 = smul.addr %s2251, 2
      %s2253 = smul.addr %s2252, 8
      %s2254 = scalar_lea.vmem %s14, %s2253
      // Predicated region
      $region85: #{egnn_forward.1} parent=75 // pred_check
        %p2255 = pneg %p419
      $region86: #{egnn_forward.1} parent=75 // pred_check_branch
        %2257 = sbr.rel (%p2255) target = $region88
      $region87: #{egnn_forward.1} parent=75 // pred_region
        _
      $region88: #{egnn_forward.1} parent=75 // pred_fallthru
        _
    $region76: #{egnn_forward.1} parent=5 // pred_fallthru
      _
    %p2258 = scmp.le.s32.totalorder 2, %s20
    // Predicated region
    $region89: #{egnn_forward.1} parent=5 // pred_check
      %p2259 = pneg %p2258
    $region90: #{egnn_forward.1} parent=5 // pred_check_branch
      %2261 = sbr.rel (%p2259) target = $region92
    $region91: #{egnn_forward.1} parent=5 // pred_region
      %s2262 = ssub.s32 %s20, 2
      // Predicated region
      $region93: #{egnn_forward.1} parent=91 // pred_check
        %p2263 = pneg %p425
      $region94: #{egnn_forward.1} parent=91 // pred_check_branch
        %2265 = sbr.rel (%p2263) target = $region96
      $region95: #{egnn_forward.1} parent=91 // pred_region
        %p2266 = scmp.lt.s32.totalorder %s31, 1
        %s2267 = scalar_select %p2266, %s31, 1
        %s2268 = smul.addr %s2267, 2
        %s2269 = smul.addr %s2268, 8
        %s2270 = scalar_lea.vmem %s14, %s2269
      $region96: #{egnn_forward.1} parent=91 // pred_fallthru
        _
    $region92: #{egnn_forward.1} parent=5 // pred_fallthru
      _
  $region6: #{egnn_forward.1} parent=0 // loop_footer
    %s24 = sadd.s32 1, %s20
  $region7: #{egnn_forward.1} parent=0 // loop_footer_branch
    %19 = sbr.rel target = $region3
  $region8: #{egnn_forward.1} parent=0 // loop_exit
    _

</llo_original>
